<compile_context>
chip_gen: v6e
topology: v6e:2x2x1
jax: 0.10.0
libtpu: 0.0.40
codegen_flags: <defaults>
</compile_context>

<pallas_src>
import functools

import jax
import jax.numpy as jnp
import numpy as np
from jax.experimental import pallas as pl
from jax.experimental.pallas import tpu as pltpu


# ----------------------------------------------------------------------------
# tiling / VMEM helpers
# ----------------------------------------------------------------------------
def _round_up(x, m):
    return ((x + m - 1) // m) * m


def _pick_tile(padded, target, mult):
    """Largest multiple of `mult` <= target that divides `padded`."""
    t = max(mult, min(_round_up(target, mult), padded))
    t = (t // mult) * mult
    while padded % t:
        t -= mult
    return t


def _gcn_tiles(n, tm_target=512, tk_target=2048):
    """Tile sizes + padded width for the NxN adjacency matmul.

    Large graphs are padded up to a multiple of tk_target so tk never
    degenerates; small graphs take the whole (128-aligned) width as tk.
    tm only needs to be a multiple of 8; since n_pad is always a multiple of
    128 here, _pick_tile returns tm >= 128.  Idempotent on already-padded Np.
    VMEM budget at the default targets (bf16 adj, D=32):
      2*(tm*tk*2 + tk*D*2 + tm*D*2) + tm*D*4  ~= 4.5 MiB  << 48 MiB (v7x cap).
    """
    if n <= tk_target:
        n_pad = _round_up(n, 128)
        tk = n_pad
    else:
        n_pad = _round_up(n, tk_target)
        tk = tk_target
    tm = _pick_tile(n_pad, tm_target, 8)
    return tm, tk, n_pad


def _vmem_limit_bytes():
    """Per-generation scoped-VMEM limit: 96 MiB on 128 MiB parts (v5e/v6e),
    48 MiB on the 64 MiB-per-TC v7x.  Conservative fallback if the query
    is unavailable."""
    try:
        cap = getattr(pltpu.get_tpu_info(), "vmem_capacity_bytes", 64 * 1024 * 1024)
    except Exception:  # pragma: no cover - defensive
        cap = 64 * 1024 * 1024
    return int(min(96 * 1024 * 1024, (cap * 3) // 4))


# ----------------------------------------------------------------------------
# Pallas kernels
# ----------------------------------------------------------------------------
def _gcn_layer_kernel(adj_ref, ego_ref, out_ref, acc_ref):
    """One LightGCN propagation layer tile: out[g] = adj[g] @ ego[g]."""
    k = pl.program_id(2)

    @pl.when(k == 0)
    def _():
        acc_ref[...] = jnp.zeros_like(acc_ref)

    # adj and ego are both bf16 already (no in-loop cast); f32 MXU accumulation.
    acc_ref[...] += jnp.dot(adj_ref[...], ego_ref[...],
                            preferred_element_type=jnp.float32)

    @pl.when(k == pl.num_programs(2) - 1)
    def _():
        out_ref[...] = acc_ref[...].astype(out_ref.dtype)


def _gcn_final_kernel(adj_ref, ego_ref, sum_ref, out_ref, acc_ref, *, inv_count):
    """Last layer + fused epilogue: layer-mean and (sub-graph views) L2 norm."""
    g = pl.program_id(1)
    k = pl.program_id(2)

    @pl.when(k == 0)
    def _():
        acc_ref[...] = jnp.zeros_like(acc_ref)

    acc_ref[...] += jnp.dot(adj_ref[...], ego_ref[...],
                            preferred_element_type=jnp.float32)

    @pl.when(k == pl.num_programs(2) - 1)
    def _():
        mean = (acc_ref[...] + sum_ref[...]) * inv_count
        nrm = jnp.sqrt(jnp.sum(mean * mean, axis=1, keepdims=True))
        # graph 0 (main norm_adj) keeps the raw layer-mean; graphs 1/2 (SGL
        # sub-graph views) get the fused F.normalize(dim=1) epilogue.
        denom = jnp.where(g == 0, 1.0, jnp.maximum(nrm, 1e-12))
        out_ref[...] = mean / denom


def _ssl_kernel(a1_ref, a2_ref, f2t_ref, o_ref):
    """ssl_logits tile: a1 @ full2_t_tile - rowdot(a1, a2)[:, None]."""
    a1 = a1_ref[...]
    # 'pos' is tile-invariant; recomputing it (B*D elementwise) is negligible
    # and keeps the grid axis safe to mark "parallel".
    pos = jnp.sum(a1 * a2_ref[...], axis=1, keepdims=True)
    tot = jnp.dot(a1, f2t_ref[...], preferred_element_type=jnp.float32)
    o_ref[...] = tot - pos


# ----------------------------------------------------------------------------
# pallas_call wrappers
# ----------------------------------------------------------------------------
def _gcn_layer_call(adj_stack, ego_stack, tm, tk, vmem_limit, *,
                    sum_stack=None, inv_count=None):
    G, Np, _ = adj_stack.shape
    D = ego_stack.shape[-1]
    # Row axis first so megacore (v7x) shards over the many row tiles instead
    # of the odd-sized G=3 axis; reduction axis last (arbitrary).
    grid = (Np // tm, G, Np // tk)

    adj_spec = pl.BlockSpec((None, tm, tk), lambda i, g, k: (g, i, k))
    ego_spec = pl.BlockSpec((None, tk, D), lambda i, g, k: (g, k, 0))
    row_spec = pl.BlockSpec((None, tm, D), lambda i, g, k: (g, i, 0))

    is_final = sum_stack is not None
    out_dtype = jnp.float32 if is_final else jnp.bfloat16

    # Bytes: bf16 adj stream + ego re-streamed once per row tile (bf16) +
    # outputs (+ f32 layer-sum read on the final layer).
    bytes_accessed = (G * Np * Np * 2
                      + (Np // tm) * G * Np * D * 2
                      + G * Np * D * (4 if is_final else 2)
                      + (G * Np * D * 4 if is_final else 0))
    cost = pl.CostEstimate(flops=2 * G * Np * Np * D,
                           transcendentals=0,
                           bytes_accessed=bytes_accessed)
    cparams = pltpu.CompilerParams(
        dimension_semantics=("parallel", "parallel", "arbitrary"),
        vmem_limit_bytes=vmem_limit)

    if is_final:
        kernel = functools.partial(_gcn_final_kernel, inv_count=inv_count)
        in_specs = [adj_spec, ego_spec, row_spec]
        args = (adj_stack, ego_stack, sum_stack)
    else:
        kernel = _gcn_layer_kernel
        in_specs = [adj_spec, ego_spec]
        args = (adj_stack, ego_stack)

    return pl.pallas_call(
        kernel,
        out_shape=jax.ShapeDtypeStruct((G, Np, D), out_dtype),
        grid=grid,
        in_specs=in_specs,
        out_specs=row_spec,
        scratch_shapes=[pltpu.VMEM((tm, D), jnp.float32)],
        compiler_params=cparams,
        cost_estimate=cost,
    )(*args)


def ssl_logits_call(a1, a2, full2, vmem_limit, *, tn_target=512):
    """a1 @ full2.T - rowdot(a1, a2)[:, None], tiled over full2 rows."""
    B, D = a1.shape
    M = full2.shape[0]
    Mp = _round_up(M, 128)
    tn = _pick_tile(Mp, tn_target, 128)          # lane-dense output tile
    # Pre-transpose the RHS to (D, Mp): lane-dense loads, plain (B,D)@(D,tn).
    f2t = jnp.pad(full2, ((0, Mp - M), (0, 0))).T

    out = pl.pallas_call(
        _ssl_kernel,
        out_shape=jax.ShapeDtypeStruct((B, Mp), jnp.float32),
        grid=(Mp // tn,),
        in_specs=[pl.BlockSpec((B, D), lambda j: (0, 0)),
                  pl.BlockSpec((B, D), lambda j: (0, 0)),
                  pl.BlockSpec((D, tn), lambda j: (0, j))],
        out_specs=pl.BlockSpec((B, tn), lambda j: (0, j)),
        compiler_params=pltpu.CompilerParams(
            dimension_semantics=("parallel",),
            vmem_limit_bytes=vmem_limit),
    )(a1, a2, f2t)
    return out[:, :M]


# ----------------------------------------------------------------------------
# One-time graph preprocessing (keep OUTSIDE jit: graphs are static)
# ----------------------------------------------------------------------------
def prepare_graphs(norm_adj, sub_graph1, sub_graph2):
    """Pad to tile multiples, cast to bf16, stack the 3 graph views.

    Runs once, eagerly; the resulting [3, Np, Np] bf16 stack is reused on
    every forward call so no per-call pad/cast/stack HBM traffic remains.
    """
    N = norm_adj.shape[0]
    _, _, Np = _gcn_tiles(N)
    pad = Np - N
    return jnp.stack(
        [jnp.pad(a, ((0, pad), (0, pad))).astype(jnp.bfloat16)
         for a in (norm_adj, sub_graph1, sub_graph2)], axis=0)


# ----------------------------------------------------------------------------
# Full _LightGCN.forward
# ----------------------------------------------------------------------------
def lightgcn_forward(params, adj_stack, users, items, neg_items, n_layers):
    num_users, D = params["user_emb"].shape
    num_items = params["item_emb"].shape[0]
    N = num_users + num_items
    G, Np, _ = adj_stack.shape
    tm, tk, _ = _gcn_tiles(Np)                   # idempotent on padded Np
    vmem_limit = _vmem_limit_bytes()

    ego0 = jnp.concatenate([params["user_emb"], params["item_emb"]], axis=0)
    ego0_p = jnp.pad(ego0, ((0, Np - N), (0, 0)))                  # f32 [Np, D]

    # ---- LightGCN propagation: one tiled pallas_call per layer -------------
    if n_layers == 0:
        base = jnp.stack([ego0_p] * G, axis=0)
        nrm = jnp.maximum(jnp.linalg.norm(base, axis=-1, keepdims=True), 1e-12)
        all_emb = jnp.concatenate([base[:1], base[1:] / nrm[1:]], axis=0)
    else:
        ego = jnp.stack([ego0_p.astype(jnp.bfloat16)] * G, axis=0)  # bf16 stream
        acc = jnp.stack([ego0_p] * G, axis=0)                       # f32 layer-sum
        for _ in range(n_layers - 1):
            ego = _gcn_layer_call(adj_stack, ego, tm, tk, vmem_limit)   # bf16 out
            acc = acc + ego.astype(jnp.float32)   # cheap N x D elementwise glue
        all_emb = _gcn_layer_call(adj_stack, ego, tm, tk, vmem_limit,
                                  sum_stack=acc,
                                  inv_count=1.0 / float(n_layers + 1))  # f32 out

    a_main, a1, a2 = all_emb[0], all_emb[1], all_emb[2]
    user_embeddings, item_embeddings = a_main[:num_users], a_main[num_users:N]
    user_embeddings1, item_embeddings1 = a1[:num_users], a1[num_users:N]
    user_embeddings2, item_embeddings2 = a2[:num_users], a2[num_users:N]

    # ---- F.embedding lookups (glue) ----------------------------------------
    user_embs = jnp.take(user_embeddings, users, axis=0)
    item_embs = jnp.take(item_embeddings, items, axis=0)
    neg_item_embs = jnp.take(item_embeddings, neg_items, axis=0)
    user_embs1 = jnp.take(user_embeddings1, users, axis=0)
    item_embs1 = jnp.take(item_embeddings1, items, axis=0)
    user_embs2 = jnp.take(user_embeddings2, users, axis=0)
    item_embs2 = jnp.take(item_embeddings2, items, axis=0)

    # sup_logits: tiny row-dots -> plain JAX (not worth a kernel launch).
    sup_logits = jnp.sum(user_embs * item_embs, axis=1) \
        - jnp.sum(user_embs * neg_item_embs, axis=1)

    ssl_logits_user = ssl_logits_call(user_embs1, user_embs2, user_embeddings2,
                                      vmem_limit)
    ssl_logits_item = ssl_logits_call(item_embs1, item_embs2, item_embeddings2,
                                      vmem_limit)
    return sup_logits, ssl_logits_user, ssl_logits_item


# ----------------------------------------------------------------------------
# Pure-JAX reference (correctness sanity check)
# ----------------------------------------------------------------------------
def _ref_forward(params, norm_adj, sub1, sub2, users, items, neg_items, n_layers):
    def gcn(adj):
        ego = jnp.concatenate([params["user_emb"], params["item_emb"]], axis=0)
        embs = [ego]
        for _ in range(n_layers):
            ego = adj @ ego
            embs.append(ego)
        return jnp.mean(jnp.stack(embs, axis=1), axis=1)

    nu = params["user_emb"].shape[0]

    def norm(x):
        return x / jnp.maximum(jnp.linalg.norm(x, axis=1, keepdims=True), 1e-12)

    a = gcn(norm_adj); a1 = gcn(sub1); a2 = gcn(sub2)
    ue, ie = a[:nu], a[nu:]
    ue1, ie1 = norm(a1[:nu]), norm(a1[nu:])
    ue2, ie2 = norm(a2[:nu]), norm(a2[nu:])
    u, i, n = ue[users], ie[items], ie[neg_items]
    u1, i1 = ue1[users], ie1[items]
    u2, i2 = ue2[users], ie2[items]
    sup = jnp.sum(u * i, -1) - jnp.sum(u * n, -1)
    ssl_u = u1 @ ue2.T - jnp.sum(u1 * u2, -1)[:, None]
    ssl_i = i1 @ ie2.T - jnp.sum(i1 * i2, -1)[:, None]
    return sup, ssl_u, ssl_i


# ----------------------------------------------------------------------------
# Main
# ----------------------------------------------------------------------------
if __name__ == "__main__":
    num_users, num_items, embed_dim, n_layers, batch = 24, 40, 32, 2, 8
    N = num_users + num_items

    key = jax.random.PRNGKey(0)
    ks = jax.random.split(key, 10)

    params = {
        "user_emb": jax.random.normal(ks[0], (num_users, embed_dim), jnp.float32) * 0.1,
        "item_emb": jax.random.normal(ks[1], (num_items, embed_dim), jnp.float32) * 0.1,
    }

    def make_norm_adj(k):
        # Symmetric-normalized bipartite adjacency (dense stand-in for sparse adj).
        R = (jax.random.uniform(k, (num_users, num_items)) < 0.25).astype(jnp.float32)
        A = jnp.zeros((N, N), jnp.float32)
        A = A.at[:num_users, num_users:].set(R)
        A = A.at[num_users:, :num_users].set(R.T)
        deg = A.sum(axis=1)
        dinv = jnp.where(deg > 0, 1.0 / jnp.sqrt(jnp.maximum(deg, 1e-12)), 0.0)
        return dinv[:, None] * A * dinv[None, :]

    norm_adj = make_norm_adj(ks[2])
    sub_graph1 = make_norm_adj(ks[3])
    sub_graph2 = make_norm_adj(ks[4])

    users = jax.random.randint(ks[5], (batch,), 0, num_users, jnp.int32)
    items = jax.random.randint(ks[6], (batch,), 0, num_items, jnp.int32)
    neg_items = jax.random.randint(ks[7], (batch,), 0, num_items, jnp.int32)

    # One-time graph preprocessing (pad + bf16 cast + stack) OUTSIDE jit.
    adj_stack = jax.block_until_ready(prepare_graphs(norm_adj, sub_graph1, sub_graph2))

    fwd = jax.jit(functools.partial(lightgcn_forward, n_layers=n_layers))
    sup_logits, ssl_u, ssl_i = fwd(params, adj_stack, users, items, neg_items)
    jax.block_until_ready((sup_logits, ssl_u, ssl_i))

    # Sanity check vs pure-JAX f32 reference (kernels stream adj AND ego in
    # bf16, accumulate in f32 -> relaxed tolerance).
    r_sup, r_u, r_i = _ref_forward(params, norm_adj, sub_graph1, sub_graph2,
                                   users, items, neg_items, n_layers)
    assert sup_logits.shape == (batch,)
    assert ssl_u.shape == (batch, num_users)
    assert ssl_i.shape == (batch, num_items)
    np.testing.assert_allclose(np.asarray(sup_logits), np.asarray(r_sup), rtol=2e-2, atol=2e-2)
    np.testing.assert_allclose(np.asarray(ssl_u), np.asarray(r_u), rtol=2e-2, atol=2e-2)
    np.testing.assert_allclose(np.asarray(ssl_i), np.asarray(r_i), rtol=2e-2, atol=2e-2)

    print("KERNEL_OK")
</pallas_src>

<mosaic_0001>
module attributes {stable_mosaic.version = 11 : i64} {
  func.func @_gcn_layer_kernel(%arg0: i32, %arg1: i32, %arg2: i32, %arg3: memref<1x128x128xbf16, #tpu.memory_space<vmem>>, %arg4: memref<1x128x32xbf16, #tpu.memory_space<vmem>>, %arg5: memref<1x128x32xbf16, #tpu.memory_space<vmem>>, %arg6: memref<128x32xf32, #tpu.memory_space<vmem>>) attributes {dimension_semantics = [#tpu.dimension_semantics<parallel>, #tpu.dimension_semantics<parallel>, #tpu.dimension_semantics<arbitrary>], iteration_bounds = array<i64: 1, 3, 1>, scalar_prefetch = 0 : i64, scratch_operands = 1 : i64, tpu.core_type = #tpu.core_type<tc>, window_params = [{transform_indices = @transform_0, window_bounds = array<i64: 1, 128, 128>}, {transform_indices = @transform_1, window_bounds = array<i64: 1, 128, 32>}, {transform_indices = @transform_2, window_bounds = array<i64: 1, 128, 32>}]} {
    %c0_i32 = arith.constant 0 : i32
    %0 = arith.cmpi eq, %arg2, %c0_i32 : i32
    %1 = arith.extui %0 : i1 to i32
    %c0_i32_0 = arith.constant 0 : i32
    %2 = arith.cmpi ne, %1, %c0_i32_0 : i32
    scf.if %2 {
      %cst_12 = arith.constant 0.000000e+00 : f32
      %14 = vector.broadcast %cst_12 : f32 to vector<128x32xf32>
      %c0_13 = arith.constant 0 : index
      %c0_14 = arith.constant 0 : index
      %15 = vector.load %arg6[%c0_13, %c0_14] : memref<128x32xf32, #tpu.memory_space<vmem>>, vector<128x32xf32>
      tpu.vector_store %arg6[%c0_13, %c0_14], %14 {strides = array<i32>} : memref<128x32xf32, #tpu.memory_space<vmem>>, vector<128x32xf32>,
    } else {
    }
    %c0 = arith.constant 0 : index
    %c0_1 = arith.constant 0 : index
    %3 = vector.load %arg6[%c0, %c0_1] : memref<128x32xf32, #tpu.memory_space<vmem>>, vector<128x32xf32>
    %c0_2 = arith.constant 0 : index
    %c0_3 = arith.constant 0 : index
    %c0_4 = arith.constant 0 : index
    %4 = vector.load %arg3[%c0_2, %c0_3, %c0_4] : memref<1x128x128xbf16, #tpu.memory_space<vmem>>, vector<1x128x128xbf16>
    %5 = vector.shape_cast %4 : vector<1x128x128xbf16> to vector<128x128xbf16>
    %c0_5 = arith.constant 0 : index
    %c0_6 = arith.constant 0 : index
    %c0_7 = arith.constant 0 : index
    %6 = vector.load %arg4[%c0_5, %c0_6, %c0_7] : memref<1x128x32xbf16, #tpu.memory_space<vmem>>, vector<1x128x32xbf16>
    %7 = vector.shape_cast %6 : vector<1x128x32xbf16> to vector<128x32xbf16>
    %cst = arith.constant dense<0.000000e+00> : vector<128x32xf32>
    %8 = tpu.matmul %5, %7, %cst {dimension_numbers = #tpu.dot_dimension_numbers<[1], [0], [0], [1], [0, 0, 1, 1], [], []>} : vector<128x128xbf16>, vector<128x32xbf16>, vector<128x32xf32> -> vector<128x32xf32>
    %9 = arith.addf %3, %8 : vector<128x32xf32>
    %c0_8 = arith.constant 0 : index
    %c0_9 = arith.constant 0 : index
    %10 = vector.load %arg6[%c0_8, %c0_9] : memref<128x32xf32, #tpu.memory_space<vmem>>, vector<128x32xf32>
    tpu.vector_store %arg6[%c0_8, %c0_9], %9 {strides = array<i32>} : memref<128x32xf32, #tpu.memory_space<vmem>>, vector<128x32xf32>,
    %c0_i32_10 = arith.constant 0 : i32
    %11 = arith.cmpi eq, %arg2, %c0_i32_10 : i32
    %12 = arith.extui %11 : i1 to i32
    %c0_i32_11 = arith.constant 0 : i32
    %13 = arith.cmpi ne, %12, %c0_i32_11 : i32
    scf.if %13 {
      %c0_12 = arith.constant 0 : index
      %c0_13 = arith.constant 0 : index
      %14 = vector.load %arg6[%c0_12, %c0_13] : memref<128x32xf32, #tpu.memory_space<vmem>>, vector<128x32xf32>
      %15 = arith.truncf %14 : vector<128x32xf32> to vector<128x32xbf16>
      %c0_14 = arith.constant 0 : index
      %c0_15 = arith.constant 0 : index
      %c0_16 = arith.constant 0 : index
      %16 = vector.load %arg5[%c0_14, %c0_15, %c0_16] : memref<1x128x32xbf16, #tpu.memory_space<vmem>>, vector<1x128x32xbf16>
      %17 = vector.shape_cast %16 : vector<1x128x32xbf16> to vector<128x32xbf16>
      %18 = vector.shape_cast %15 : vector<128x32xbf16> to vector<1x128x32xbf16>
      tpu.vector_store %arg5[%c0_14, %c0_15, %c0_16], %18 {strides = array<i32>} : memref<1x128x32xbf16, #tpu.memory_space<vmem>>, vector<1x128x32xbf16>,
    } else {
    }
    return
  }
  func.func @transform_0(%arg0: i32, %arg1: i32, %arg2: i32) -> (i32, i32, i32) {
    %c0_i32 = arith.constant 0 : i32
    return %arg1, %arg0, %arg2 : i32, i32, i32
  }
  func.func @transform_1(%arg0: i32, %arg1: i32, %arg2: i32) -> (i32, i32, i32) {
    %c0_i32 = arith.constant 0 : i32
    %c0_i32_0 = arith.constant 0 : i32
    return %arg1, %arg2, %c0_i32 : i32, i32, i32
  }
  func.func @transform_2(%arg0: i32, %arg1: i32, %arg2: i32) -> (i32, i32, i32) {
    %c0_i32 = arith.constant 0 : i32
    %c0_i32_0 = arith.constant 0 : i32
    return %arg1, %arg0, %c0_i32 : i32, i32, i32
  }
}

module attributes {stable_mosaic.version = 11 : i64} {
  func.func @_gcn_final_kernel(%arg0: i32, %arg1: i32, %arg2: i32, %arg3: memref<1x128x128xbf16, #tpu.memory_space<vmem>>, %arg4: memref<1x128x32xbf16, #tpu.memory_space<vmem>>, %arg5: memref<1x128x32xf32, #tpu.memory_space<vmem>>, %arg6: memref<1x128x32xf32, #tpu.memory_space<vmem>>, %arg7: memref<128x32xf32, #tpu.memory_space<vmem>>) attributes {dimension_semantics = [#tpu.dimension_semantics<parallel>, #tpu.dimension_semantics<parallel>, #tpu.dimension_semantics<arbitrary>], iteration_bounds = array<i64: 1, 3, 1>, scalar_prefetch = 0 : i64, scratch_operands = 1 : i64, tpu.core_type = #tpu.core_type<tc>, window_params = [{transform_indices = @transform_0, window_bounds = array<i64: 1, 128, 128>}, {transform_indices = @transform_1, window_bounds = array<i64: 1, 128, 32>}, {transform_indices = @transform_2, window_bounds = array<i64: 1, 128, 32>}, {transform_indices = @transform_3, window_bounds = array<i64: 1, 128, 32>}]} {
    %c0_i32 = arith.constant 0 : i32
    %0 = arith.cmpi eq, %arg2, %c0_i32 : i32
    %1 = arith.extui %0 : i1 to i32
    %c0_i32_0 = arith.constant 0 : i32
    %2 = arith.cmpi ne, %1, %c0_i32_0 : i32
    scf.if %2 {
      %cst_12 = arith.constant 0.000000e+00 : f32
      %14 = vector.broadcast %cst_12 : f32 to vector<128x32xf32>
      %c0_13 = arith.constant 0 : index
      %c0_14 = arith.constant 0 : index
      %15 = vector.load %arg7[%c0_13, %c0_14] : memref<128x32xf32, #tpu.memory_space<vmem>>, vector<128x32xf32>
      tpu.vector_store %arg7[%c0_13, %c0_14], %14 {strides = array<i32>} : memref<128x32xf32, #tpu.memory_space<vmem>>, vector<128x32xf32>,
    } else {
    }
    %c0 = arith.constant 0 : index
    %c0_1 = arith.constant 0 : index
    %3 = vector.load %arg7[%c0, %c0_1] : memref<128x32xf32, #tpu.memory_space<vmem>>, vector<128x32xf32>
    %c0_2 = arith.constant 0 : index
    %c0_3 = arith.constant 0 : index
    %c0_4 = arith.constant 0 : index
    %4 = vector.load %arg3[%c0_2, %c0_3, %c0_4] : memref<1x128x128xbf16, #tpu.memory_space<vmem>>, vector<1x128x128xbf16>
    %5 = vector.shape_cast %4 : vector<1x128x128xbf16> to vector<128x128xbf16>
    %c0_5 = arith.constant 0 : index
    %c0_6 = arith.constant 0 : index
    %c0_7 = arith.constant 0 : index
    %6 = vector.load %arg4[%c0_5, %c0_6, %c0_7] : memref<1x128x32xbf16, #tpu.memory_space<vmem>>, vector<1x128x32xbf16>
    %7 = vector.shape_cast %6 : vector<1x128x32xbf16> to vector<128x32xbf16>
    %cst = arith.constant dense<0.000000e+00> : vector<128x32xf32>
    %8 = tpu.matmul %5, %7, %cst {dimension_numbers = #tpu.dot_dimension_numbers<[1], [0], [0], [1], [0, 0, 1, 1], [], []>} : vector<128x128xbf16>, vector<128x32xbf16>, vector<128x32xf32> -> vector<128x32xf32>
    %9 = arith.addf %3, %8 : vector<128x32xf32>
    %c0_8 = arith.constant 0 : index
    %c0_9 = arith.constant 0 : index
    %10 = vector.load %arg7[%c0_8, %c0_9] : memref<128x32xf32, #tpu.memory_space<vmem>>, vector<128x32xf32>
    tpu.vector_store %arg7[%c0_8, %c0_9], %9 {strides = array<i32>} : memref<128x32xf32, #tpu.memory_space<vmem>>, vector<128x32xf32>,
    %c0_i32_10 = arith.constant 0 : i32
    %11 = arith.cmpi eq, %arg2, %c0_i32_10 : i32
    %12 = arith.extui %11 : i1 to i32
    %c0_i32_11 = arith.constant 0 : i32
    %13 = arith.cmpi ne, %12, %c0_i32_11 : i32
    scf.if %13 {
      %c0_12 = arith.constant 0 : index
      %c0_13 = arith.constant 0 : index
      %14 = vector.load %arg7[%c0_12, %c0_13] : memref<128x32xf32, #tpu.memory_space<vmem>>, vector<128x32xf32>
      %c0_14 = arith.constant 0 : index
      %c0_15 = arith.constant 0 : index
      %c0_16 = arith.constant 0 : index
      %15 = vector.load %arg5[%c0_14, %c0_15, %c0_16] : memref<1x128x32xf32, #tpu.memory_space<vmem>>, vector<1x128x32xf32>
      %16 = vector.shape_cast %15 : vector<1x128x32xf32> to vector<128x32xf32>
      %17 = arith.addf %14, %16 : vector<128x32xf32>
      %cst_17 = arith.constant 0.333333343 : f32
      %18 = vector.broadcast %cst_17 : f32 to vector<128x32xf32>
      %19 = arith.mulf %17, %18 : vector<128x32xf32>
      %20 = arith.mulf %19, %19 : vector<128x32xf32>
      %cst_18 = arith.constant dense<0.000000e+00> : vector<128xf32>
      %21 = vector.multi_reduction <add>, %20, %cst_18 [1] : vector<128x32xf32> to vector<128xf32>
      %22 = vector.shape_cast %21 : vector<128xf32> to vector<128x1xf32>
      %23 = math.sqrt %22 : vector<128x1xf32>
      %c0_i32_19 = arith.constant 0 : i32
      %24 = arith.cmpi eq, %arg1, %c0_i32_19 : i32
      %cst_20 = arith.constant 9.99999996E-13 : f32
      %25 = vector.broadcast %cst_20 : f32 to vector<128x1xf32>
      %26 = arith.maximumf %23, %25 : vector<128x1xf32>
      %cst_21 = arith.constant 1.000000e+00 : f32
      %27 = vector.broadcast %cst_21 : f32 to vector<128x1xf32>
      %28 = arith.select %24, %27, %26 : vector<128x1xf32>
      %29 = vector.broadcast %28 : vector<128x1xf32> to vector<128x32xf32>
      %30 = arith.divf %19, %29 : vector<128x32xf32>
      %c0_22 = arith.constant 0 : index
      %c0_23 = arith.constant 0 : index
      %c0_24 = arith.constant 0 : index
      %31 = vector.load %arg6[%c0_22, %c0_23, %c0_24] : memref<1x128x32xf32, #tpu.memory_space<vmem>>, vector<1x128x32xf32>
      %32 = vector.shape_cast %31 : vector<1x128x32xf32> to vector<128x32xf32>
      %33 = vector.shape_cast %30 : vector<128x32xf32> to vector<1x128x32xf32>
      tpu.vector_store %arg6[%c0_22, %c0_23, %c0_24], %33 {strides = array<i32>} : memref<1x128x32xf32, #tpu.memory_space<vmem>>, vector<1x128x32xf32>,
    } else {
    }
    return
  }
  func.func @transform_0(%arg0: i32, %arg1: i32, %arg2: i32) -> (i32, i32, i32) {
    %c0_i32 = arith.constant 0 : i32
    return %arg1, %arg0, %arg2 : i32, i32, i32
  }
  func.func @transform_1(%arg0: i32, %arg1: i32, %arg2: i32) -> (i32, i32, i32) {
    %c0_i32 = arith.constant 0 : i32
    %c0_i32_0 = arith.constant 0 : i32
    return %arg1, %arg2, %c0_i32 : i32, i32, i32
  }
  func.func @transform_2(%arg0: i32, %arg1: i32, %arg2: i32) -> (i32, i32, i32) {
    %c0_i32 = arith.constant 0 : i32
    %c0_i32_0 = arith.constant 0 : i32
    return %arg1, %arg0, %c0_i32 : i32, i32, i32
  }
  func.func @transform_3(%arg0: i32, %arg1: i32, %arg2: i32) -> (i32, i32, i32) {
    %c0_i32 = arith.constant 0 : i32
    %c0_i32_0 = arith.constant 0 : i32
    return %arg1, %arg0, %c0_i32 : i32, i32, i32
  }
}

module attributes {stable_mosaic.version = 11 : i64} {
  func.func @_ssl_kernel(%arg0: i32, %arg1: memref<8x32xf32, #tpu.memory_space<vmem>>, %arg2: memref<8x32xf32, #tpu.memory_space<vmem>>, %arg3: memref<32x128xf32, #tpu.memory_space<vmem>>, %arg4: memref<8x128xf32, #tpu.memory_space<vmem>>) attributes {dimension_semantics = [#tpu.dimension_semantics<parallel>], iteration_bounds = array<i64: 1>, scalar_prefetch = 0 : i64, scratch_operands = 0 : i64, tpu.core_type = #tpu.core_type<tc>, window_params = [{pipeline_mode = #tpu.pipeline_mode<synchronous>, transform_indices = @transform_0, window_bounds = array<i64: 8, 32>}, {pipeline_mode = #tpu.pipeline_mode<synchronous>, transform_indices = @transform_1, window_bounds = array<i64: 8, 32>}, {transform_indices = @transform_2, window_bounds = array<i64: 32, 128>}, {transform_indices = @transform_3, window_bounds = array<i64: 8, 128>}]} {
    %c0 = arith.constant 0 : index
    %c0_0 = arith.constant 0 : index
    %0 = vector.load %arg1[%c0, %c0_0] : memref<8x32xf32, #tpu.memory_space<vmem>>, vector<8x32xf32>
    %c0_1 = arith.constant 0 : index
    %c0_2 = arith.constant 0 : index
    %1 = vector.load %arg2[%c0_1, %c0_2] : memref<8x32xf32, #tpu.memory_space<vmem>>, vector<8x32xf32>
    %2 = arith.mulf %0, %1 : vector<8x32xf32>
    %cst = arith.constant dense<0.000000e+00> : vector<8xf32>
    %3 = vector.multi_reduction <add>, %2, %cst [1] : vector<8x32xf32> to vector<8xf32>
    %4 = vector.shape_cast %3 : vector<8xf32> to vector<8x1xf32>
    %c0_3 = arith.constant 0 : index
    %c0_4 = arith.constant 0 : index
    %5 = vector.load %arg3[%c0_3, %c0_4] : memref<32x128xf32, #tpu.memory_space<vmem>>, vector<32x128xf32>
    %cst_5 = arith.constant dense<0.000000e+00> : vector<8x128xf32>
    %6 = tpu.matmul %0, %5, %cst_5 {dimension_numbers = #tpu.dot_dimension_numbers<[1], [0], [0], [1], [0, 0, 1, 1], [], []>} : vector<8x32xf32>, vector<32x128xf32>, vector<8x128xf32> -> vector<8x128xf32>
    %7 = vector.broadcast %4 : vector<8x1xf32> to vector<8x128xf32>
    %8 = arith.subf %6, %7 : vector<8x128xf32>
    %c0_6 = arith.constant 0 : index
    %c0_7 = arith.constant 0 : index
    %9 = vector.load %arg4[%c0_6, %c0_7] : memref<8x128xf32, #tpu.memory_space<vmem>>, vector<8x128xf32>
    tpu.vector_store %arg4[%c0_6, %c0_7], %8 {strides = array<i32>} : memref<8x128xf32, #tpu.memory_space<vmem>>, vector<8x128xf32>,
    return
  }
  func.func @transform_0(%arg0: i32) -> (i32, i32) {
    %c0_i32 = arith.constant 0 : i32
    %c0_i32_0 = arith.constant 0 : i32
    %c0_i32_1 = arith.constant 0 : i32
    return %c0_i32, %c0_i32_0 : i32, i32
  }
  func.func @transform_1(%arg0: i32) -> (i32, i32) {
    %c0_i32 = arith.constant 0 : i32
    %c0_i32_0 = arith.constant 0 : i32
    %c0_i32_1 = arith.constant 0 : i32
    return %c0_i32, %c0_i32_0 : i32, i32
  }
  func.func @transform_2(%arg0: i32) -> (i32, i32) {
    %c0_i32 = arith.constant 0 : i32
    %c0_i32_0 = arith.constant 0 : i32
    return %c0_i32, %arg0 : i32, i32
  }
  func.func @transform_3(%arg0: i32) -> (i32, i32) {
    %c0_i32 = arith.constant 0 : i32
    %c0_i32_0 = arith.constant 0 : i32
    return %c0_i32, %arg0 : i32, i32
  }
}

</mosaic_0001>

<llo_original>
// kernel: sub.1
$region0: #{sub.1}
  #allocation2 [shape = 's32[1]{0}', space=sflag, size = 0x4, scoped, tag = 'scoped memory for sub.1']
  %s0 = inlined_call_operand.vmem [shape: f32[8], index: 0, kind: input, shape index: {}]
  %s1 = inlined_call_operand.vmem [shape: f32[8], index: 1, kind: input, shape index: {}]
  %s2 = inlined_call_operand.hbm [shape: f32[8], index: 2, kind: output, shape index: {}]
  $region1: #{sub.1} parent=0
    #allocation0 [shape = 'u8[512]{0}', space=vmem, size = 0x400, scoped, tag = 'operand span for operand 2']
    #allocation1 [shape = 's32[1]{0}', space=sflag, size = 0x4, scoped, tag = 'scoped memory for sub.1']
    %3 = vsyncpa [#allocation1], 0
    %v4 = vld [vmem:[%s0] sm:$0x1]
    %v5 = vld [vmem:[%s1] sm:$0x1]
    %6 = xla_tuple %v4, %v5
    %7 = xla_tuple %6
    %v8 = vsub.f32 %v4, %v5
    %9 = xla_tuple %v8
    %10 = vst [vmem:[#allocation0] sm:$0x1] %v8
    %s12 = ssub.s32 16, 16
    %13 = vsyncadd [#allocation1], %s12
    %s15 = sshll.u32 [#allocation0], 4
    %s16 = int_to_ptr.vmem [resolvable:$true] %s15
    %18 = dma.vmem_to_hbm [thread:$0]  %s16, 16, %s2, [#allocation1]
    %19 = dma.done [#allocation1], 16
    %20 = vsyncpa [#allocation1], 1

// kernel: lightgcn_forward.5
$region0: #{lightgcn_forward.5}
  #allocation0 [shape = 'u32[]', space=smem, size = 0x4, offset = 0x4, fixed_abs, tag = 'smem constant byte address 0x4 - core index']
  #allocation1 [shape = 'u32[144,128]{1,0:T(1,128)}', space=vmem, size = 0x12000, scoped, tag = 'internal scratch']
  #allocation2 [shape = 'f32[128,32]{1,0:T(8,128)}', space=vmem, size = 0x10000, scoped, tag = 'scratch operand']
  %s0 = inlined_call_operand.vmem [shape: bf16[3,128,128], index: 0, kind: input, shape index: {}]
  %s1 = inlined_call_operand.vmem [shape: bf16[3,128,32], index: 1, kind: input, shape index: {}]
  %s2 = inlined_call_operand.vmem [shape: f32[3,128,32], index: 2, kind: input, shape index: {}]
  %s3 = inlined_call_operand.vmem [shape: f32[3,128,32], index: 3, kind: output, shape index: {}]
  %s4 = sld [smem:[#allocation0]]
  $region53: #{lightgcn_forward.5} parent=0
    _
  %s6 = ssub.s32 1, %s4
  %s7 = scalar_select 0, %s6, %s4
  loop: start=0, step=1, limit=5
  $region2: #{lightgcn_forward.5} parent=0 // loop_pre_header
    _
  $region3: #{lightgcn_forward.5} parent=0 // loop_header
    %s9 = sphi 0, %s13
    %p10 = scmp.ge.s32.totalorder %s9, 5
    %s16 = sphi 0, %s35
    %s17 = sphi 0, %s31
    %s18 = sphi 0, %s27
    %s19 = sphi 0, %s16
    %s20 = sphi 0, %s17
    %s21 = sphi 0, %s18
    %s22 = sphi 0, %s19
    %s23 = sphi 0, %s20
    %s24 = sphi 0, %s21
    %s42 = sphi 0, %s44
    %s45 = sphi 0, %s42
    %s46 = sphi 0, %s45
    %s62 = sphi 0, %s46
    %s70 = sphi 0, %s72
    %s73 = sphi 0, %s70
    %s74 = sphi 0, %s73
    %s90 = sphi 0, %s74
    %s98 = sphi 0, %s100
    %s101 = sphi 0, %s98
    %s102 = sphi 0, %s101
    %s118 = sphi 0, %s102
    %s126 = sphi 0, %s128
    %s129 = sphi 0, %s126
    %s130 = sphi 0, %s129
    %s146 = sphi 0, %s130
  $region4: #{lightgcn_forward.5} parent=0 // loop_header_branch
    %12 = sbr.rel (%p10) target = $region8
  $region5: #{lightgcn_forward.5} parent=0 // loop_body
    %s14 = ssub.s32 %s9, 1
    %s15 = ssub.s32 %s9, 2
    %s25 = sadd.s32 1, %s18
    %p26 = scmp.ge.s32.totalorder %s25, 1
    %s27 = scalar_select %p26, 0, %s25
    %s28 = sadd.s32 1, %s17
    %s29 = scalar_select %p26, %s28, %s17
    %p30 = scmp.ge.s32.totalorder %s29, 3
    %s31 = scalar_select %p30, 0, %s29
    %s32 = sadd.s32 1, %s16
    %s33 = scalar_select %p30, %s32, %s16
    %p34 = scmp.ge.s32.totalorder %s33, 1
    %s35 = scalar_select %p34, 0, %s33
    %s36 = ssub.s32 %s17, %s31
    %s37 = ssub.s32 %s16, %s35
    %s38 = sor.u32 %s36, %s37
    %s39 = ssub.s32 %s18, %s27
    %s40 = sor.u32 %s38, %s39
    %p41 = scmp.eq.s32.totalorder %s40, 0
    %s43 = sadd.s32 %s42, 1
    %s44 = scalar_select %p41, %s42, %s43
    %p47 = pneg %p41
    %p48 = scmp.eq.s32.totalorder %s9, 2
    %p49 = por %p47, %p48
    %p50 = scmp.ne.s32.totalorder %s42, %s45
    %p51 = scmp.eq.s32.totalorder %s9, 0
    %p52 = por %p50, %p51
    %p53 = scmp.ne.s32.totalorder %s42, %s45
    %p54 = scmp.eq.s32.totalorder %s14, 2
    %p55 = por %p53, %p54
    %p56 = scmp.ne.s32.totalorder %s45, %s46
    %p57 = scmp.eq.s32.totalorder %s14, 0
    %p58 = por %p56, %p57
    %p59 = scmp.ne.s32.totalorder %s45, %s46
    %p60 = scmp.eq.s32.totalorder %s15, 2
    %p61 = por %p59, %p60
    %p63 = scmp.ne.s32.totalorder %s46, %s62
    %p64 = scmp.eq.s32.totalorder %s15, 0
    %p65 = por %p63, %p64
    %s66 = ssub.s32 %s17, %s31
    %s67 = ssub.s32 %s18, %s27
    %s68 = sor.u32 %s66, %s67
    %p69 = scmp.eq.s32.totalorder %s68, 0
    %s71 = sadd.s32 %s70, 1
    %s72 = scalar_select %p69, %s70, %s71
    %p75 = pneg %p69
    %p76 = scmp.eq.s32.totalorder %s9, 2
    %p77 = por %p75, %p76
    %p78 = scmp.ne.s32.totalorder %s70, %s73
    %p79 = scmp.eq.s32.totalorder %s9, 0
    %p80 = por %p78, %p79
    %p81 = scmp.ne.s32.totalorder %s70, %s73
    %p82 = scmp.eq.s32.totalorder %s14, 2
    %p83 = por %p81, %p82
    %p84 = scmp.ne.s32.totalorder %s73, %s74
    %p85 = scmp.eq.s32.totalorder %s14, 0
    %p86 = por %p84, %p85
    %p87 = scmp.ne.s32.totalorder %s73, %s74
    %p88 = scmp.eq.s32.totalorder %s15, 2
    %p89 = por %p87, %p88
    %p91 = scmp.ne.s32.totalorder %s74, %s90
    %p92 = scmp.eq.s32.totalorder %s15, 0
    %p93 = por %p91, %p92
    %s94 = ssub.s32 %s17, %s31
    %s95 = ssub.s32 %s16, %s35
    %s96 = sor.u32 %s94, %s95
    %p97 = scmp.eq.s32.totalorder %s96, 0
    %s99 = sadd.s32 %s98, 1
    %s100 = scalar_select %p97, %s98, %s99
    %p103 = pneg %p97
    %p104 = scmp.eq.s32.totalorder %s9, 2
    %p105 = por %p103, %p104
    %p106 = scmp.ne.s32.totalorder %s98, %s101
    %p107 = scmp.eq.s32.totalorder %s9, 0
    %p108 = por %p106, %p107
    %p109 = scmp.ne.s32.totalorder %s98, %s101
    %p110 = scmp.eq.s32.totalorder %s14, 2
    %p111 = por %p109, %p110
    %p112 = scmp.ne.s32.totalorder %s101, %s102
    %p113 = scmp.eq.s32.totalorder %s14, 0
    %p114 = por %p112, %p113
    %p115 = scmp.ne.s32.totalorder %s101, %s102
    %p116 = scmp.eq.s32.totalorder %s15, 2
    %p117 = por %p115, %p116
    %p119 = scmp.ne.s32.totalorder %s102, %s118
    %p120 = scmp.eq.s32.totalorder %s15, 0
    %p121 = por %p119, %p120
    %s122 = ssub.s32 %s17, %s31
    %s123 = ssub.s32 %s16, %s35
    %s124 = sor.u32 %s122, %s123
    %p125 = scmp.eq.s32.totalorder %s124, 0
    %s127 = sadd.s32 %s126, 1
    %s128 = scalar_select %p125, %s126, %s127
    %p131 = pneg %p125
    %p132 = scmp.eq.s32.totalorder %s9, 2
    %p133 = por %p131, %p132
    %p134 = scmp.ne.s32.totalorder %s126, %s129
    %p135 = scmp.eq.s32.totalorder %s9, 0
    %p136 = por %p134, %p135
    %p137 = scmp.ne.s32.totalorder %s126, %s129
    %p138 = scmp.eq.s32.totalorder %s14, 2
    %p139 = por %p137, %p138
    %p140 = scmp.ne.s32.totalorder %s129, %s130
    %p141 = scmp.eq.s32.totalorder %s14, 0
    %p142 = por %p140, %p141
    %p143 = scmp.ne.s32.totalorder %s129, %s130
    %p144 = scmp.eq.s32.totalorder %s15, 2
    %p145 = por %p143, %p144
    %p147 = scmp.ne.s32.totalorder %s130, %s146
    %p148 = scmp.eq.s32.totalorder %s15, 0
    %p149 = por %p147, %p148
    %p150 = scmp.le.s32.totalorder 1, %s9
    %p151 = scmp.lt.s32.totalorder %s9, 4
    %p152 = pnand %p150, %p151
    %p153 = pneg %p152
    // Predicated region
    $region9: #{lightgcn_forward.5} parent=5 // pred_check
      _
    $region10: #{lightgcn_forward.5} parent=5 // pred_check_branch
      %155 = sbr.rel (%p152) target = $region12
    $region11: #{lightgcn_forward.5} parent=5 // pred_region
      %s156 = ssub.s32 %s9, 1
    $region12: #{lightgcn_forward.5} parent=5 // pred_fallthru
      _
    %p157 = scmp.lt.s32.totalorder %s9, 3
    // Predicated region
    $region13: #{lightgcn_forward.5} parent=5 // pred_check
      %p158 = pneg %p157
    $region14: #{lightgcn_forward.5} parent=5 // pred_check_branch
      %160 = sbr.rel (%p158) target = $region16
    $region15: #{lightgcn_forward.5} parent=5 // pred_region
      // Predicated region
      $region17: #{lightgcn_forward.5} parent=15 // pred_check
        %p161 = pneg %p52
      $region18: #{lightgcn_forward.5} parent=15 // pred_check_branch
        %163 = sbr.rel (%p161) target = $region20
      $region19: #{lightgcn_forward.5} parent=15 // pred_region
        %s164 = smul.u32 16, %s16
        %p165 = scmp.lt.s32.totalorder %s17, 2
        %s166 = scalar_select %p165, %s17, 2
        %p167 = scmp.lt.s32.totalorder %s164, 15
        %s168 = scalar_select %p167, %s164, 15
        %p169 = scmp.lt.s32.totalorder %s18, 0
        %s170 = scalar_select %p169, %s18, 0
        %s171 = sadd.s32 %s170, %s168
        %s172 = smul.addr %s166, 16
        %s173 = sadd.s32 %s171, %s172
        %s174 = smul.addr %s173, 4
        %s175 = scalar_lea.vmem %s0, %s174
        %s176 = smul.u32 16, %s16
      $region20: #{lightgcn_forward.5} parent=15 // pred_fallthru
        _
      // Predicated region
      $region21: #{lightgcn_forward.5} parent=15 // pred_check
        %p177 = pneg %p80
      $region22: #{lightgcn_forward.5} parent=15 // pred_check_branch
        %179 = sbr.rel (%p177) target = $region24
      $region23: #{lightgcn_forward.5} parent=15 // pred_region
        %s180 = smul.u32 16, %s18
        %p181 = scmp.lt.s32.totalorder %s17, 2
        %s182 = scalar_select %p181, %s17, 2
        %p183 = scmp.lt.s32.totalorder %s180, 15
        %s184 = scalar_select %p183, %s180, 15
        %s185 = smul.addr %s182, 16
        %s186 = sadd.s32 %s184, %s185
        %s187 = smul.addr %s186, 4
        %s188 = scalar_lea.vmem %s1, %s187
        %s189 = smul.u32 16, %s18
      $region24: #{lightgcn_forward.5} parent=15 // pred_fallthru
        _
      // Predicated region
      $region25: #{lightgcn_forward.5} parent=15 // pred_check
        %p190 = pneg %p108
      $region26: #{lightgcn_forward.5} parent=15 // pred_check_branch
        %192 = sbr.rel (%p190) target = $region28
      $region27: #{lightgcn_forward.5} parent=15 // pred_region
        %s193 = smul.u32 16, %s16
        %p194 = scmp.lt.s32.totalorder %s17, 2
        %s195 = scalar_select %p194, %s17, 2
        %p196 = scmp.lt.s32.totalorder %s193, 15
        %s197 = scalar_select %p196, %s193, 15
        %s198 = smul.addr %s195, 16
        %s199 = sadd.s32 %s197, %s198
        %s200 = smul.addr %s199, 8
        %s201 = scalar_lea.vmem %s2, %s200
        %s202 = smul.u32 16, %s16
      $region28: #{lightgcn_forward.5} parent=15 // pred_fallthru
        _
    $region16: #{lightgcn_forward.5} parent=5 // pred_fallthru
      _
    %p203 = scmp.le.s32.totalorder 1, %s9
    %p204 = scmp.lt.s32.totalorder %s9, 4
    %p205 = pnand %p203, %p204
    %p206 = pneg %p205
    // Predicated region
    $region29: #{lightgcn_forward.5} parent=5 // pred_check
      _
    $region30: #{lightgcn_forward.5} parent=5 // pred_check_branch
      %208 = sbr.rel (%p205) target = $region32
    $region31: #{lightgcn_forward.5} parent=5 // pred_region
      %s209 = ssub.s32 %s9, 1
      %s210 = smul.u32 16, %s19
      %p211 = scmp.lt.s32.totalorder %s20, 2
      %s212 = scalar_select %p211, %s20, 2
      %p213 = scmp.lt.s32.totalorder %s210, 15
      %s214 = scalar_select %p213, %s210, 15
      %p215 = scmp.lt.s32.totalorder %s21, 0
      %s216 = scalar_select %p215, %s21, 0
      %s217 = sadd.s32 %s216, %s214
      %s218 = smul.addr %s212, 16
      %s219 = sadd.s32 %s217, %s218
      %s220 = smul.addr %s219, 4
      %s221 = scalar_lea.vmem %s0, %s220
      %p222 = pneg %p58
      %p223 = pneg %p55
      %s224 = smul.u32 16, %s21
      %p225 = scmp.lt.s32.totalorder %s20, 2
      %s226 = scalar_select %p225, %s20, 2
      %p227 = scmp.lt.s32.totalorder %s224, 15
      %s228 = scalar_select %p227, %s224, 15
      %s229 = smul.addr %s226, 16
      %s230 = sadd.s32 %s228, %s229
      %s231 = smul.addr %s230, 4
      %s232 = scalar_lea.vmem %s1, %s231
      %p233 = pneg %p86
      %p234 = pneg %p83
      %s235 = smul.u32 16, %s19
      %p236 = scmp.lt.s32.totalorder %s20, 2
      %s237 = scalar_select %p236, %s20, 2
      %p238 = scmp.lt.s32.totalorder %s235, 15
      %s239 = scalar_select %p238, %s235, 15
      %s240 = smul.addr %s237, 16
      %s241 = sadd.s32 %s239, %s240
      %s242 = smul.addr %s241, 8
      %s243 = scalar_lea.vmem %s2, %s242
      %p244 = pneg %p114
      %p245 = pneg %p111
      %p246 = pneg %p142
      %p247 = pneg %p139
      %s248 = smul.u32 16, %s19
      %p249 = scmp.lt.s32.totalorder %s20, 2
      %s250 = scalar_select %p249, %s20, 2
      %p251 = scmp.lt.s32.totalorder %s248, 15
      %s252 = scalar_select %p251, %s248, 15
      %s253 = smul.addr %s250, 16
      %s254 = sadd.s32 %s252, %s253
      %s255 = smul.addr %s254, 8
      %s256 = scalar_lea.vmem %s3, %s255
      %s257 = smul.u32 16, %s19
      %p258 = scmp.lt.s32.totalorder %s20, 2
      %s259 = scalar_select %p258, %s20, 2
      %p260 = scmp.lt.s32.totalorder %s257, 15
      %s261 = scalar_select %p260, %s257, 15
      %p262 = scmp.lt.s32.totalorder %s21, 0
      %s263 = scalar_select %p262, %s21, 0
      %s264 = sadd.s32 %s263, %s261
      %s265 = smul.addr %s259, 16
      %s266 = sadd.s32 %s264, %s265
      %s267 = smul.addr %s266, 4
      %s268 = scalar_lea.vmem %s0, %s267
      %s269 = smul.u32 16, %s19
      %s270 = smul.u32 16, %s21
      %p271 = scmp.lt.s32.totalorder %s20, 2
      %s272 = scalar_select %p271, %s20, 2
      %p273 = scmp.lt.s32.totalorder %s270, 15
      %s274 = scalar_select %p273, %s270, 15
      %s275 = smul.addr %s272, 16
      %s276 = sadd.s32 %s274, %s275
      %s277 = smul.addr %s276, 4
      %s278 = scalar_lea.vmem %s1, %s277
      %s279 = smul.u32 16, %s21
      %s280 = smul.u32 16, %s19
      %p281 = scmp.lt.s32.totalorder %s20, 2
      %s282 = scalar_select %p281, %s20, 2
      %p283 = scmp.lt.s32.totalorder %s280, 15
      %s284 = scalar_select %p283, %s280, 15
      %s285 = smul.addr %s282, 16
      %s286 = sadd.s32 %s284, %s285
      %s287 = smul.addr %s286, 8
      %s288 = scalar_lea.vmem %s2, %s287
      %s289 = smul.u32 16, %s19
      %s290 = smul.u32 16, %s19
      %p291 = scmp.lt.s32.totalorder %s20, 2
      %s292 = scalar_select %p291, %s20, 2
      %p293 = scmp.lt.s32.totalorder %s290, 15
      %s294 = scalar_select %p293, %s290, 15
      %s295 = smul.addr %s292, 16
      %s296 = sadd.s32 %s294, %s295
      %s297 = smul.addr %s296, 8
      %s298 = scalar_lea.vmem %s3, %s297
      %s299 = smul.u32 16, %s19
      %p301 = scmp.eq.s32.totalorder %s21, 0
      // Predicated region
      $region33: #{lightgcn_forward.5} parent=31 // pred_check
        %p302 = pneg %p301
      $region34: #{lightgcn_forward.5} parent=31 // pred_check_branch
        %304 = sbr.rel (%p302) target = $region36
      $region35: #{lightgcn_forward.5} parent=31 // pred_region
        %vm305 = vcmask 261120
        %306 = vst.msk [vmem:[#allocation2] sm:$0xff] %vm305, 0.0
        %307 = vst.msk [vmem:[#allocation2 + $0x8] sm:$0xff] %vm305, 0.0
        %308 = vst.msk [vmem:[#allocation2 + $0x10] sm:$0xff] %vm305, 0.0
        %309 = vst.msk [vmem:[#allocation2 + $0x18] sm:$0xff] %vm305, 0.0
        %310 = vst.msk [vmem:[#allocation2 + $0x20] sm:$0xff] %vm305, 0.0
        %311 = vst.msk [vmem:[#allocation2 + $0x28] sm:$0xff] %vm305, 0.0
        %312 = vst.msk [vmem:[#allocation2 + $0x30] sm:$0xff] %vm305, 0.0
        %313 = vst.msk [vmem:[#allocation2 + $0x38] sm:$0xff] %vm305, 0.0
        %314 = vst.msk [vmem:[#allocation2 + $0x40] sm:$0xff] %vm305, 0.0
        %315 = vst.msk [vmem:[#allocation2 + $0x48] sm:$0xff] %vm305, 0.0
        %316 = vst.msk [vmem:[#allocation2 + $0x50] sm:$0xff] %vm305, 0.0
        %317 = vst.msk [vmem:[#allocation2 + $0x58] sm:$0xff] %vm305, 0.0
        %318 = vst.msk [vmem:[#allocation2 + $0x60] sm:$0xff] %vm305, 0.0
        %319 = vst.msk [vmem:[#allocation2 + $0x68] sm:$0xff] %vm305, 0.0
        %320 = vst.msk [vmem:[#allocation2 + $0x70] sm:$0xff] %vm305, 0.0
        %321 = vst.msk [vmem:[#allocation2 + $0x78] sm:$0xff] %vm305, 0.0
      $region36: #{lightgcn_forward.5} parent=31 // pred_fallthru
        _
      %v322 = vld [vmem:[#allocation2] sm:$0xff]
      %v323 = vld [vmem:[#allocation2 + $0x8] sm:$0xff]
      %v324 = vld [vmem:[#allocation2 + $0x10] sm:$0xff]
      %v325 = vld [vmem:[#allocation2 + $0x18] sm:$0xff]
      %v326 = vld [vmem:[#allocation2 + $0x20] sm:$0xff]
      %v327 = vld [vmem:[#allocation2 + $0x28] sm:$0xff]
      %v328 = vld [vmem:[#allocation2 + $0x30] sm:$0xff]
      %v329 = vld [vmem:[#allocation2 + $0x38] sm:$0xff]
      %v330 = vld [vmem:[#allocation2 + $0x40] sm:$0xff]
      %v331 = vld [vmem:[#allocation2 + $0x48] sm:$0xff]
      %v332 = vld [vmem:[#allocation2 + $0x50] sm:$0xff]
      %v333 = vld [vmem:[#allocation2 + $0x58] sm:$0xff]
      %v334 = vld [vmem:[#allocation2 + $0x60] sm:$0xff]
      %v335 = vld [vmem:[#allocation2 + $0x68] sm:$0xff]
      %v336 = vld [vmem:[#allocation2 + $0x70] sm:$0xff]
      %v337 = vld [vmem:[#allocation2 + $0x78] sm:$0xff]
      %v338 = vld [vmem:[%s268] sm:$0xf]
      %v339 = vld [vmem:[%s268 + $0x4] sm:$0xf]
      %v340 = vld [vmem:[%s268 + $0x8] sm:$0xf]
      %v341 = vld [vmem:[%s268 + $0xc] sm:$0xf]
      %v342 = vld [vmem:[%s268 + $0x10] sm:$0xf]
      %v343 = vld [vmem:[%s268 + $0x14] sm:$0xf]
      %v344 = vld [vmem:[%s268 + $0x18] sm:$0xf]
      %v345 = vld [vmem:[%s268 + $0x1c] sm:$0xf]
      %v346 = vld [vmem:[%s268 + $0x20] sm:$0xf]
      %v347 = vld [vmem:[%s268 + $0x24] sm:$0xf]
      %v348 = vld [vmem:[%s268 + $0x28] sm:$0xf]
      %v349 = vld [vmem:[%s268 + $0x2c] sm:$0xf]
      %v350 = vld [vmem:[%s268 + $0x30] sm:$0xf]
      %v351 = vld [vmem:[%s268 + $0x34] sm:$0xf]
      %v352 = vld [vmem:[%s268 + $0x38] sm:$0xf]
      %v353 = vld [vmem:[%s268 + $0x3c] sm:$0xf]
      %v354 = vld [vmem:[%s278] sm:$0xf]
      %v355 = vld [vmem:[%s278 + $0x4] sm:$0xf]
      %v356 = vld [vmem:[%s278 + $0x8] sm:$0xf]
      %v357 = vld [vmem:[%s278 + $0xc] sm:$0xf]
      %v358 = vld [vmem:[%s278 + $0x10] sm:$0xf]
      %v359 = vld [vmem:[%s278 + $0x14] sm:$0xf]
      %v360 = vld [vmem:[%s278 + $0x18] sm:$0xf]
      %v361 = vld [vmem:[%s278 + $0x1c] sm:$0xf]
      %v362 = vld [vmem:[%s278 + $0x20] sm:$0xf]
      %v363 = vld [vmem:[%s278 + $0x24] sm:$0xf]
      %v364 = vld [vmem:[%s278 + $0x28] sm:$0xf]
      %v365 = vld [vmem:[%s278 + $0x2c] sm:$0xf]
      %v366 = vld [vmem:[%s278 + $0x30] sm:$0xf]
      %v367 = vld [vmem:[%s278 + $0x34] sm:$0xf]
      %v368 = vld [vmem:[%s278 + $0x38] sm:$0xf]
      %v369 = vld [vmem:[%s278 + $0x3c] sm:$0xf]
      %v386 = vunpack.c.l.b16 %v338
      %v387 = vunpack.c.l.b16 %v339
      %v388 = vunpack.c.l.b16 %v340
      %v389 = vunpack.c.l.b16 %v341
      %v390 = vunpack.c.l.b16 %v342
      %v391 = vunpack.c.l.b16 %v343
      %v392 = vunpack.c.l.b16 %v344
      %v393 = vunpack.c.l.b16 %v345
      %v394 = vunpack.c.l.b16 %v346
      %v395 = vunpack.c.l.b16 %v347
      %v396 = vunpack.c.l.b16 %v348
      %v397 = vunpack.c.l.b16 %v349
      %v398 = vunpack.c.l.b16 %v350
      %v399 = vunpack.c.l.b16 %v351
      %v400 = vunpack.c.l.b16 %v352
      %v401 = vunpack.c.l.b16 %v353
      %v402 = vpack.c.b16 %v387, %v386
      %v403 = vpack.c.b16 %v389, %v388
      %v404 = vpack.c.b16 %v391, %v390
      %v405 = vpack.c.b16 %v393, %v392
      %v406 = vpack.c.b16 %v395, %v394
      %v407 = vpack.c.b16 %v397, %v396
      %v408 = vpack.c.b16 %v399, %v398
      %v409 = vpack.c.b16 %v401, %v400
      %v434 = vunpack.c.l.b16 %v354
      %v435 = vunpack.c.l.b16 %v355
      %v436 = vunpack.c.l.b16 %v356
      %v437 = vunpack.c.l.b16 %v357
      %v438 = vunpack.c.l.b16 %v358
      %v439 = vunpack.c.l.b16 %v359
      %v440 = vunpack.c.l.b16 %v360
      %v441 = vunpack.c.l.b16 %v361
      %v442 = vunpack.c.l.b16 %v362
      %v443 = vunpack.c.l.b16 %v363
      %v444 = vunpack.c.l.b16 %v364
      %v445 = vunpack.c.l.b16 %v365
      %v446 = vunpack.c.l.b16 %v366
      %v447 = vunpack.c.l.b16 %v367
      %v448 = vunpack.c.l.b16 %v368
      %v449 = vunpack.c.l.b16 %v369
      %v450 = vpack.c.b16 %v435, %v434
      %v451 = vpack.c.b16 %v437, %v436
      %v452 = vpack.c.b16 %v439, %v438
      %v453 = vpack.c.b16 %v441, %v440
      %v454 = vpack.c.b16 %v443, %v442
      %v455 = vpack.c.b16 %v445, %v444
      %v456 = vpack.c.b16 %v447, %v446
      %v457 = vpack.c.b16 %v449, %v448
      %466 = vmatprep.subr.bf16.mxu0 0
      %467 = vmatpush1.bf16.msra.mxu0 %v457
      %468 = vmatprep.subr.bf16.mxu0 0
      %469 = vmatpush1.bf16.msra.mxu0 %v456
      %470 = vmatprep.subr.bf16.mxu0 0
      %471 = vmatpush1.bf16.msra.mxu0 %v455
      %472 = vmatprep.subr.bf16.mxu0 0
      %473 = vmatpush1.bf16.msra.mxu0 %v454
      %474 = vmatprep.subr.bf16.mxu0 0
      %475 = vmatpush1.bf16.msra.mxu0 %v453
      %476 = vmatprep.subr.bf16.mxu0 0
      %477 = vmatpush1.bf16.msra.mxu0 %v452
      %478 = vmatprep.subr.bf16.mxu0 0
      %479 = vmatpush1.bf16.msra.mxu0 %v451
      %480 = vmatprep.subr.bf16.mxu0 0
      %481 = vmatpush1.bf16.msra.mxu0 %v450
      %482 = vmatprep.subr.bf16.mxu0 0
      %483 = vmatpush2.bf16.msra.mxu0 0
      %484 = vmatprep.subr.bf16.mxu0 0
      %485 = vmatpush2.bf16.msra.mxu0 0
      %486 = vmatprep.subr.bf16.mxu0 0
      %487 = vmatpush2.bf16.msra.mxu0 0
      %488 = vmatprep.subr.bf16.mxu0 0
      %489 = vmatpush2.bf16.msra.mxu0 0
      %490 = vmatprep.subr.bf16.mxu0 0
      %491 = vmatpush2.bf16.msra.mxu0 0
      %492 = vmatprep.subr.bf16.mxu0 0
      %493 = vmatpush2.bf16.msra.mxu0 0
      %494 = vmatprep.subr.bf16.mxu0 0
      %495 = vmatpush2.bf16.msra.mxu0 0
      %496 = vmatprep.subr.bf16.mxu0 0
      %497 = vmatpush2.bf16.msra.mxu0 0
      %498 = vmatprep.mubr.bf16.mxu0 0
      %499 = vmatmul.mubr.bf16.gmra.mxu0 %v402
      %v500 = vpop.f32.mrf.mxu0
      %v501 = vadd.f32 0.0, %v500
      %v502 = vpop.f32.mrf.mxu0
      %v503 = vpop.f32.mrf.mxu0
      %v504 = vadd.f32 0.0, %v503
      %v505 = vpop.f32.mrf.mxu0
      %506 = vmatprep.mubr.bf16.mxu0 0
      %507 = vmatmul.mubr.bf16.gmra.mxu0 %v403
      %v508 = vpop.f32.mrf.mxu0
      %v509 = vadd.f32 0.0, %v508
      %v510 = vpop.f32.mrf.mxu0
      %v511 = vpop.f32.mrf.mxu0
      %v512 = vadd.f32 0.0, %v511
      %v513 = vpop.f32.mrf.mxu0
      %514 = vmatprep.mubr.bf16.mxu0 0
      %515 = vmatmul.mubr.bf16.gmra.mxu0 %v404
      %v516 = vpop.f32.mrf.mxu0
      %v517 = vadd.f32 0.0, %v516
      %v518 = vpop.f32.mrf.mxu0
      %v519 = vpop.f32.mrf.mxu0
      %v520 = vadd.f32 0.0, %v519
      %v521 = vpop.f32.mrf.mxu0
      %522 = vmatprep.mubr.bf16.mxu0 0
      %523 = vmatmul.mubr.bf16.gmra.mxu0 %v405
      %v524 = vpop.f32.mrf.mxu0
      %v525 = vadd.f32 0.0, %v524
      %v526 = vpop.f32.mrf.mxu0
      %v527 = vpop.f32.mrf.mxu0
      %v528 = vadd.f32 0.0, %v527
      %v529 = vpop.f32.mrf.mxu0
      %530 = vmatprep.mubr.bf16.mxu0 0
      %531 = vmatmul.mubr.bf16.gmra.mxu0 %v406
      %v532 = vpop.f32.mrf.mxu0
      %v533 = vadd.f32 0.0, %v532
      %v534 = vpop.f32.mrf.mxu0
      %v535 = vpop.f32.mrf.mxu0
      %v536 = vadd.f32 0.0, %v535
      %v537 = vpop.f32.mrf.mxu0
      %538 = vmatprep.mubr.bf16.mxu0 0
      %539 = vmatmul.mubr.bf16.gmra.mxu0 %v407
      %v540 = vpop.f32.mrf.mxu0
      %v541 = vadd.f32 0.0, %v540
      %v542 = vpop.f32.mrf.mxu0
      %v543 = vpop.f32.mrf.mxu0
      %v544 = vadd.f32 0.0, %v543
      %v545 = vpop.f32.mrf.mxu0
      %546 = vmatprep.mubr.bf16.mxu0 0
      %547 = vmatmul.mubr.bf16.gmra.mxu0 %v408
      %v548 = vpop.f32.mrf.mxu0
      %v549 = vadd.f32 0.0, %v548
      %v550 = vpop.f32.mrf.mxu0
      %v551 = vpop.f32.mrf.mxu0
      %v552 = vadd.f32 0.0, %v551
      %v553 = vpop.f32.mrf.mxu0
      %554 = vmatprep.mubr.bf16.mxu0 0
      %555 = vmatmul.mubr.bf16.gmra.mxu0 %v409
      %v556 = vpop.f32.mrf.mxu0
      %v557 = vadd.f32 0.0, %v556
      %v558 = vpop.f32.mrf.mxu0
      %v559 = vpop.f32.mrf.mxu0
      %v560 = vadd.f32 0.0, %v559
      %v561 = vpop.f32.mrf.mxu0
      %562 = vdwg.mxu0
      %v563 = vadd.f32 %v322, %v501
      %v564 = vadd.f32 %v323, %v504
      %v565 = vadd.f32 %v324, %v509
      %v566 = vadd.f32 %v325, %v512
      %v567 = vadd.f32 %v326, %v517
      %v568 = vadd.f32 %v327, %v520
      %v569 = vadd.f32 %v328, %v525
      %v570 = vadd.f32 %v329, %v528
      %v571 = vadd.f32 %v330, %v533
      %v572 = vadd.f32 %v331, %v536
      %v573 = vadd.f32 %v332, %v541
      %v574 = vadd.f32 %v333, %v544
      %v575 = vadd.f32 %v334, %v549
      %v576 = vadd.f32 %v335, %v552
      %v577 = vadd.f32 %v336, %v557
      %v578 = vadd.f32 %v337, %v560
      %vm579 = vcmask 261120
      %580 = vst.msk [vmem:[#allocation2] sm:$0xff] %vm579, %v563
      %581 = vst.msk [vmem:[#allocation2 + $0x8] sm:$0xff] %vm579, %v564
      %582 = vst.msk [vmem:[#allocation2 + $0x10] sm:$0xff] %vm579, %v565
      %583 = vst.msk [vmem:[#allocation2 + $0x18] sm:$0xff] %vm579, %v566
      %584 = vst.msk [vmem:[#allocation2 + $0x20] sm:$0xff] %vm579, %v567
      %585 = vst.msk [vmem:[#allocation2 + $0x28] sm:$0xff] %vm579, %v568
      %586 = vst.msk [vmem:[#allocation2 + $0x30] sm:$0xff] %vm579, %v569
      %587 = vst.msk [vmem:[#allocation2 + $0x38] sm:$0xff] %vm579, %v570
      %588 = vst.msk [vmem:[#allocation2 + $0x40] sm:$0xff] %vm579, %v571
      %589 = vst.msk [vmem:[#allocation2 + $0x48] sm:$0xff] %vm579, %v572
      %590 = vst.msk [vmem:[#allocation2 + $0x50] sm:$0xff] %vm579, %v573
      %591 = vst.msk [vmem:[#allocation2 + $0x58] sm:$0xff] %vm579, %v574
      %592 = vst.msk [vmem:[#allocation2 + $0x60] sm:$0xff] %vm579, %v575
      %593 = vst.msk [vmem:[#allocation2 + $0x68] sm:$0xff] %vm579, %v576
      %594 = vst.msk [vmem:[#allocation2 + $0x70] sm:$0xff] %vm579, %v577
      %595 = vst.msk [vmem:[#allocation2 + $0x78] sm:$0xff] %vm579, %v578
      // Predicated region
      $region37: #{lightgcn_forward.5} parent=31 // pred_check
        %p596 = pneg %p301
      $region38: #{lightgcn_forward.5} parent=31 // pred_check_branch
        %598 = sbr.rel (%p596) target = $region40
      $region39: #{lightgcn_forward.5} parent=31 // pred_region
        %v599 = vld [vmem:[#allocation2] sm:$0xff]
        %v600 = vld [vmem:[#allocation2 + $0x8] sm:$0xff]
        %v601 = vld [vmem:[#allocation2 + $0x10] sm:$0xff]
        %v602 = vld [vmem:[#allocation2 + $0x18] sm:$0xff]
        %v603 = vld [vmem:[#allocation2 + $0x20] sm:$0xff]
        %v604 = vld [vmem:[#allocation2 + $0x28] sm:$0xff]
        %v605 = vld [vmem:[#allocation2 + $0x30] sm:$0xff]
        %v606 = vld [vmem:[#allocation2 + $0x38] sm:$0xff]
        %v607 = vld [vmem:[#allocation2 + $0x40] sm:$0xff]
        %v608 = vld [vmem:[#allocation2 + $0x48] sm:$0xff]
        %v609 = vld [vmem:[#allocation2 + $0x50] sm:$0xff]
        %v610 = vld [vmem:[#allocation2 + $0x58] sm:$0xff]
        %v611 = vld [vmem:[#allocation2 + $0x60] sm:$0xff]
        %v612 = vld [vmem:[#allocation2 + $0x68] sm:$0xff]
        %v613 = vld [vmem:[#allocation2 + $0x70] sm:$0xff]
        %v614 = vld [vmem:[#allocation2 + $0x78] sm:$0xff]
        %v615 = vld [vmem:[%s288] sm:$0xff]
        %v616 = vld [vmem:[%s288 + $0x8] sm:$0xff]
        %v617 = vld [vmem:[%s288 + $0x10] sm:$0xff]
        %v618 = vld [vmem:[%s288 + $0x18] sm:$0xff]
        %v619 = vld [vmem:[%s288 + $0x20] sm:$0xff]
        %v620 = vld [vmem:[%s288 + $0x28] sm:$0xff]
        %v621 = vld [vmem:[%s288 + $0x30] sm:$0xff]
        %v622 = vld [vmem:[%s288 + $0x38] sm:$0xff]
        %v623 = vld [vmem:[%s288 + $0x40] sm:$0xff]
        %v624 = vld [vmem:[%s288 + $0x48] sm:$0xff]
        %v625 = vld [vmem:[%s288 + $0x50] sm:$0xff]
        %v626 = vld [vmem:[%s288 + $0x58] sm:$0xff]
        %v627 = vld [vmem:[%s288 + $0x60] sm:$0xff]
        %v628 = vld [vmem:[%s288 + $0x68] sm:$0xff]
        %v629 = vld [vmem:[%s288 + $0x70] sm:$0xff]
        %v630 = vld [vmem:[%s288 + $0x78] sm:$0xff]
        %v631 = vadd.f32 %v599, %v615
        %v632 = vadd.f32 %v600, %v616
        %v633 = vadd.f32 %v601, %v617
        %v634 = vadd.f32 %v602, %v618
        %v635 = vadd.f32 %v603, %v619
        %v636 = vadd.f32 %v604, %v620
        %v637 = vadd.f32 %v605, %v621
        %v638 = vadd.f32 %v606, %v622
        %v639 = vadd.f32 %v607, %v623
        %v640 = vadd.f32 %v608, %v624
        %v641 = vadd.f32 %v609, %v625
        %v642 = vadd.f32 %v610, %v626
        %v643 = vadd.f32 %v611, %v627
        %v644 = vadd.f32 %v612, %v628
        %v645 = vadd.f32 %v613, %v629
        %v646 = vadd.f32 %v614, %v630
        %v647 = vmul.f32 %v631, 0.33333334
        %v648 = vmul.f32 %v632, 0.33333334
        %v649 = vmul.f32 %v633, 0.33333334
        %v650 = vmul.f32 %v634, 0.33333334
        %v651 = vmul.f32 %v635, 0.33333334
        %v652 = vmul.f32 %v636, 0.33333334
        %v653 = vmul.f32 %v637, 0.33333334
        %v654 = vmul.f32 %v638, 0.33333334
        %v655 = vmul.f32 %v639, 0.33333334
        %v656 = vmul.f32 %v640, 0.33333334
        %v657 = vmul.f32 %v641, 0.33333334
        %v658 = vmul.f32 %v642, 0.33333334
        %v659 = vmul.f32 %v643, 0.33333334
        %v660 = vmul.f32 %v644, 0.33333334
        %v661 = vmul.f32 %v645, 0.33333334
        %v662 = vmul.f32 %v646, 0.33333334
        %v663 = vmul.f32 %v647, %v647
        %v664 = vmul.f32 %v648, %v648
        %v665 = vmul.f32 %v649, %v649
        %v666 = vmul.f32 %v650, %v650
        %v667 = vmul.f32 %v651, %v651
        %v668 = vmul.f32 %v652, %v652
        %v669 = vmul.f32 %v653, %v653
        %v670 = vmul.f32 %v654, %v654
        %v671 = vmul.f32 %v655, %v655
        %v672 = vmul.f32 %v656, %v656
        %v673 = vmul.f32 %v657, %v657
        %v674 = vmul.f32 %v658, %v658
        %v675 = vmul.f32 %v659, %v659
        %v676 = vmul.f32 %v660, %v660
        %v677 = vmul.f32 %v661, %v661
        %v678 = vmul.f32 %v662, %v662
        %v679 = vsel %vm579, %v663, 0.0
        %680 = vadd.xlane.f32.xlu0 %v679
        %v681 = vpop.xlane.xlu0 %680
        %v682 = vsel %vm579, %v664, 0.0
        %683 = vadd.xlane.f32.xlu0 %v682
        %v684 = vpop.xlane.xlu0 %683
        %v685 = vsel %vm579, %v665, 0.0
        %686 = vadd.xlane.f32.xlu0 %v685
        %v687 = vpop.xlane.xlu0 %686
        %v688 = vsel %vm579, %v666, 0.0
        %689 = vadd.xlane.f32.xlu0 %v688
        %v690 = vpop.xlane.xlu0 %689
        %v691 = vsel %vm579, %v667, 0.0
        %692 = vadd.xlane.f32.xlu0 %v691
        %v693 = vpop.xlane.xlu0 %692
        %v694 = vsel %vm579, %v668, 0.0
        %695 = vadd.xlane.f32.xlu0 %v694
        %v696 = vpop.xlane.xlu0 %695
        %v697 = vsel %vm579, %v669, 0.0
        %698 = vadd.xlane.f32.xlu0 %v697
        %v699 = vpop.xlane.xlu0 %698
        %v700 = vsel %vm579, %v670, 0.0
        %701 = vadd.xlane.f32.xlu0 %v700
        %v702 = vpop.xlane.xlu0 %701
        %v703 = vsel %vm579, %v671, 0.0
        %704 = vadd.xlane.f32.xlu0 %v703
        %v705 = vpop.xlane.xlu0 %704
        %v706 = vsel %vm579, %v672, 0.0
        %707 = vadd.xlane.f32.xlu0 %v706
        %v708 = vpop.xlane.xlu0 %707
        %v709 = vsel %vm579, %v673, 0.0
        %710 = vadd.xlane.f32.xlu0 %v709
        %v711 = vpop.xlane.xlu0 %710
        %v712 = vsel %vm579, %v674, 0.0
        %713 = vadd.xlane.f32.xlu0 %v712
        %v714 = vpop.xlane.xlu0 %713
        %v715 = vsel %vm579, %v675, 0.0
        %716 = vadd.xlane.f32.xlu0 %v715
        %v717 = vpop.xlane.xlu0 %716
        %v718 = vsel %vm579, %v676, 0.0
        %719 = vadd.xlane.f32.xlu0 %v718
        %v720 = vpop.xlane.xlu0 %719
        %v721 = vsel %vm579, %v677, 0.0
        %722 = vadd.xlane.f32.xlu0 %v721
        %v723 = vpop.xlane.xlu0 %722
        %v724 = vsel %vm579, %v678, 0.0
        %725 = vadd.xlane.f32.xlu0 %v724
        %v726 = vpop.xlane.xlu0 %725
        %v727 = vrsqrt.pop %v681
        %v728 = vmul.f32 %v681, %v727
        %vm729 = vcmp.eq.f32.partialorder %v681, inf
        %v730 = vsel %vm729, %v681, %v728
        %vm731 = vcmp.eq.f32.partialorder %v681, 0.0
        %v732 = vand.u32 %v681, 2147483648
        %v733 = vsel %vm731, %v732, %v730
        %v734 = vrsqrt.pop %v684
        %v735 = vmul.f32 %v684, %v734
        %vm736 = vcmp.eq.f32.partialorder %v684, inf
        %v737 = vsel %vm736, %v684, %v735
        %vm738 = vcmp.eq.f32.partialorder %v684, 0.0
        %v739 = vand.u32 %v684, 2147483648
        %v740 = vsel %vm738, %v739, %v737
        %v741 = vrsqrt.pop %v687
        %v742 = vmul.f32 %v687, %v741
        %vm743 = vcmp.eq.f32.partialorder %v687, inf
        %v744 = vsel %vm743, %v687, %v742
        %vm745 = vcmp.eq.f32.partialorder %v687, 0.0
        %v746 = vand.u32 %v687, 2147483648
        %v747 = vsel %vm745, %v746, %v744
        %v748 = vrsqrt.pop %v690
        %v749 = vmul.f32 %v690, %v748
        %vm750 = vcmp.eq.f32.partialorder %v690, inf
        %v751 = vsel %vm750, %v690, %v749
        %vm752 = vcmp.eq.f32.partialorder %v690, 0.0
        %v753 = vand.u32 %v690, 2147483648
        %v754 = vsel %vm752, %v753, %v751
        %v755 = vrsqrt.pop %v693
        %v756 = vmul.f32 %v693, %v755
        %vm757 = vcmp.eq.f32.partialorder %v693, inf
        %v758 = vsel %vm757, %v693, %v756
        %vm759 = vcmp.eq.f32.partialorder %v693, 0.0
        %v760 = vand.u32 %v693, 2147483648
        %v761 = vsel %vm759, %v760, %v758
        %v762 = vrsqrt.pop %v696
        %v763 = vmul.f32 %v696, %v762
        %vm764 = vcmp.eq.f32.partialorder %v696, inf
        %v765 = vsel %vm764, %v696, %v763
        %vm766 = vcmp.eq.f32.partialorder %v696, 0.0
        %v767 = vand.u32 %v696, 2147483648
        %v768 = vsel %vm766, %v767, %v765
        %v769 = vrsqrt.pop %v699
        %v770 = vmul.f32 %v699, %v769
        %vm771 = vcmp.eq.f32.partialorder %v699, inf
        %v772 = vsel %vm771, %v699, %v770
        %vm773 = vcmp.eq.f32.partialorder %v699, 0.0
        %v774 = vand.u32 %v699, 2147483648
        %v775 = vsel %vm773, %v774, %v772
        %v776 = vrsqrt.pop %v702
        %v777 = vmul.f32 %v702, %v776
        %vm778 = vcmp.eq.f32.partialorder %v702, inf
        %v779 = vsel %vm778, %v702, %v777
        %vm780 = vcmp.eq.f32.partialorder %v702, 0.0
        %v781 = vand.u32 %v702, 2147483648
        %v782 = vsel %vm780, %v781, %v779
        %v783 = vrsqrt.pop %v705
        %v784 = vmul.f32 %v705, %v783
        %vm785 = vcmp.eq.f32.partialorder %v705, inf
        %v786 = vsel %vm785, %v705, %v784
        %vm787 = vcmp.eq.f32.partialorder %v705, 0.0
        %v788 = vand.u32 %v705, 2147483648
        %v789 = vsel %vm787, %v788, %v786
        %v790 = vrsqrt.pop %v708
        %v791 = vmul.f32 %v708, %v790
        %vm792 = vcmp.eq.f32.partialorder %v708, inf
        %v793 = vsel %vm792, %v708, %v791
        %vm794 = vcmp.eq.f32.partialorder %v708, 0.0
        %v795 = vand.u32 %v708, 2147483648
        %v796 = vsel %vm794, %v795, %v793
        %v797 = vrsqrt.pop %v711
        %v798 = vmul.f32 %v711, %v797
        %vm799 = vcmp.eq.f32.partialorder %v711, inf
        %v800 = vsel %vm799, %v711, %v798
        %vm801 = vcmp.eq.f32.partialorder %v711, 0.0
        %v802 = vand.u32 %v711, 2147483648
        %v803 = vsel %vm801, %v802, %v800
        %v804 = vrsqrt.pop %v714
        %v805 = vmul.f32 %v714, %v804
        %vm806 = vcmp.eq.f32.partialorder %v714, inf
        %v807 = vsel %vm806, %v714, %v805
        %vm808 = vcmp.eq.f32.partialorder %v714, 0.0
        %v809 = vand.u32 %v714, 2147483648
        %v810 = vsel %vm808, %v809, %v807
        %v811 = vrsqrt.pop %v717
        %v812 = vmul.f32 %v717, %v811
        %vm813 = vcmp.eq.f32.partialorder %v717, inf
        %v814 = vsel %vm813, %v717, %v812
        %vm815 = vcmp.eq.f32.partialorder %v717, 0.0
        %v816 = vand.u32 %v717, 2147483648
        %v817 = vsel %vm815, %v816, %v814
        %v818 = vrsqrt.pop %v720
        %v819 = vmul.f32 %v720, %v818
        %vm820 = vcmp.eq.f32.partialorder %v720, inf
        %v821 = vsel %vm820, %v720, %v819
        %vm822 = vcmp.eq.f32.partialorder %v720, 0.0
        %v823 = vand.u32 %v720, 2147483648
        %v824 = vsel %vm822, %v823, %v821
        %v825 = vrsqrt.pop %v723
        %v826 = vmul.f32 %v723, %v825
        %vm827 = vcmp.eq.f32.partialorder %v723, inf
        %v828 = vsel %vm827, %v723, %v826
        %vm829 = vcmp.eq.f32.partialorder %v723, 0.0
        %v830 = vand.u32 %v723, 2147483648
        %v831 = vsel %vm829, %v830, %v828
        %v832 = vrsqrt.pop %v726
        %v833 = vmul.f32 %v726, %v832
        %vm834 = vcmp.eq.f32.partialorder %v726, inf
        %v835 = vsel %vm834, %v726, %v833
        %vm836 = vcmp.eq.f32.partialorder %v726, 0.0
        %v837 = vand.u32 %v726, 2147483648
        %v838 = vsel %vm836, %v837, %v835
        %p839 = scmp.eq.s32.totalorder %s20, 0
        %v840 = vmax.f32 %v733, 1e-12
        %v841 = vmax.f32 %v740, 1e-12
        %v842 = vmax.f32 %v747, 1e-12
        %v843 = vmax.f32 %v754, 1e-12
        %v844 = vmax.f32 %v761, 1e-12
        %v845 = vmax.f32 %v768, 1e-12
        %v846 = vmax.f32 %v775, 1e-12
        %v847 = vmax.f32 %v782, 1e-12
        %v848 = vmax.f32 %v789, 1e-12
        %v849 = vmax.f32 %v796, 1e-12
        %v850 = vmax.f32 %v803, 1e-12
        %v851 = vmax.f32 %v810, 1e-12
        %v852 = vmax.f32 %v817, 1e-12
        %v853 = vmax.f32 %v824, 1e-12
        %v854 = vmax.f32 %v831, 1e-12
        %v855 = vmax.f32 %v838, 1e-12
        %s856 = scalar_select %p839, 1, 0
        %v857 = vstv %s856
        %vm858 = vcmp.eq.s32.totalorder %v857, 1
        %v859 = vsel %vm858, 1.0, %v840
        %v860 = vsel %vm858, 1.0, %v841
        %v861 = vsel %vm858, 1.0, %v842
        %v862 = vsel %vm858, 1.0, %v843
        %v863 = vsel %vm858, 1.0, %v844
        %v864 = vsel %vm858, 1.0, %v845
        %v865 = vsel %vm858, 1.0, %v846
        %v866 = vsel %vm858, 1.0, %v847
        %v867 = vsel %vm858, 1.0, %v848
        %v868 = vsel %vm858, 1.0, %v849
        %v869 = vsel %vm858, 1.0, %v850
        %v870 = vsel %vm858, 1.0, %v851
        %v871 = vsel %vm858, 1.0, %v852
        %v872 = vsel %vm858, 1.0, %v853
        %v873 = vsel %vm858, 1.0, %v854
        %v874 = vsel %vm858, 1.0, %v855
        %v875 = vrcp.pop %v859
        %v876 = vmul.f32 %v647, %v875
        %v877 = vrcp.pop %v860
        %v878 = vmul.f32 %v648, %v877
        %v879 = vrcp.pop %v861
        %v880 = vmul.f32 %v649, %v879
        %v881 = vrcp.pop %v862
        %v882 = vmul.f32 %v650, %v881
        %v883 = vrcp.pop %v863
        %v884 = vmul.f32 %v651, %v883
        %v885 = vrcp.pop %v864
        %v886 = vmul.f32 %v652, %v885
        %v887 = vrcp.pop %v865
        %v888 = vmul.f32 %v653, %v887
        %v889 = vrcp.pop %v866
        %v890 = vmul.f32 %v654, %v889
        %v891 = vrcp.pop %v867
        %v892 = vmul.f32 %v655, %v891
        %v893 = vrcp.pop %v868
        %v894 = vmul.f32 %v656, %v893
        %v895 = vrcp.pop %v869
        %v896 = vmul.f32 %v657, %v895
        %v897 = vrcp.pop %v870
        %v898 = vmul.f32 %v658, %v897
        %v899 = vrcp.pop %v871
        %v900 = vmul.f32 %v659, %v899
        %v901 = vrcp.pop %v872
        %v902 = vmul.f32 %v660, %v901
        %v903 = vrcp.pop %v873
        %v904 = vmul.f32 %v661, %v903
        %v905 = vrcp.pop %v874
        %v906 = vmul.f32 %v662, %v905
        %907 = vst.msk [vmem:[%s298] sm:$0xff] %vm579, %v876
        %908 = vst.msk [vmem:[%s298 + $0x8] sm:$0xff] %vm579, %v878
        %909 = vst.msk [vmem:[%s298 + $0x10] sm:$0xff] %vm579, %v880
        %910 = vst.msk [vmem:[%s298 + $0x18] sm:$0xff] %vm579, %v882
        %911 = vst.msk [vmem:[%s298 + $0x20] sm:$0xff] %vm579, %v884
        %912 = vst.msk [vmem:[%s298 + $0x28] sm:$0xff] %vm579, %v886
        %913 = vst.msk [vmem:[%s298 + $0x30] sm:$0xff] %vm579, %v888
        %914 = vst.msk [vmem:[%s298 + $0x38] sm:$0xff] %vm579, %v890
        %915 = vst.msk [vmem:[%s298 + $0x40] sm:$0xff] %vm579, %v892
        %916 = vst.msk [vmem:[%s298 + $0x48] sm:$0xff] %vm579, %v894
        %917 = vst.msk [vmem:[%s298 + $0x50] sm:$0xff] %vm579, %v896
        %918 = vst.msk [vmem:[%s298 + $0x58] sm:$0xff] %vm579, %v898
        %919 = vst.msk [vmem:[%s298 + $0x60] sm:$0xff] %vm579, %v900
        %920 = vst.msk [vmem:[%s298 + $0x68] sm:$0xff] %vm579, %v902
        %921 = vst.msk [vmem:[%s298 + $0x70] sm:$0xff] %vm579, %v904
        %922 = vst.msk [vmem:[%s298 + $0x78] sm:$0xff] %vm579, %v906
      $region40: #{lightgcn_forward.5} parent=31 // pred_fallthru
        _
      %s923 = smul.u32 16, %s19
      %p924 = scmp.lt.s32.totalorder %s20, 2
      %s925 = scalar_select %p924, %s20, 2
      %p926 = scmp.lt.s32.totalorder %s923, 15
      %s927 = scalar_select %p926, %s923, 15
      %s928 = smul.addr %s925, 16
      %s929 = sadd.s32 %s927, %s928
      %s930 = smul.addr %s929, 8
      %s931 = scalar_lea.vmem %s3, %s930
      // Predicated region
      $region41: #{lightgcn_forward.5} parent=31 // pred_check
        %p932 = pneg %p139
      $region42: #{lightgcn_forward.5} parent=31 // pred_check_branch
        %934 = sbr.rel (%p932) target = $region44
      $region43: #{lightgcn_forward.5} parent=31 // pred_region
        %s935 = smul.u32 16, %s19
      $region44: #{lightgcn_forward.5} parent=31 // pred_fallthru
        _
    $region32: #{lightgcn_forward.5} parent=5 // pred_fallthru
      _
    %p936 = scmp.le.s32.totalorder 2, %s9
    // Predicated region
    $region45: #{lightgcn_forward.5} parent=5 // pred_check
      %p937 = pneg %p936
    $region46: #{lightgcn_forward.5} parent=5 // pred_check_branch
      %939 = sbr.rel (%p937) target = $region48
    $region47: #{lightgcn_forward.5} parent=5 // pred_region
      %s940 = ssub.s32 %s9, 2
      // Predicated region
      $region49: #{lightgcn_forward.5} parent=47 // pred_check
        %p941 = pneg %p145
      $region50: #{lightgcn_forward.5} parent=47 // pred_check_branch
        %943 = sbr.rel (%p941) target = $region52
      $region51: #{lightgcn_forward.5} parent=47 // pred_region
        %s944 = smul.u32 16, %s22
        %p945 = scmp.lt.s32.totalorder %s23, 2
        %s946 = scalar_select %p945, %s23, 2
        %p947 = scmp.lt.s32.totalorder %s944, 15
        %s948 = scalar_select %p947, %s944, 15
        %s949 = smul.addr %s946, 16
        %s950 = sadd.s32 %s948, %s949
        %s951 = smul.addr %s950, 8
        %s952 = scalar_lea.vmem %s3, %s951
      $region52: #{lightgcn_forward.5} parent=47 // pred_fallthru
        _
    $region48: #{lightgcn_forward.5} parent=5 // pred_fallthru
      _
  $region6: #{lightgcn_forward.5} parent=0 // loop_footer
    %s13 = sadd.s32 1, %s9
  $region7: #{lightgcn_forward.5} parent=0 // loop_footer_branch
    %8 = sbr.rel target = $region3
  $region8: #{lightgcn_forward.5} parent=0 // loop_exit
    _

// kernel: lightgcn_forward.4
$region0: #{lightgcn_forward.4}
  #allocation0 [shape = 'u32[]', space=smem, size = 0x4, offset = 0x4, fixed_abs, tag = 'smem constant byte address 0x4 - core index']
  #allocation1 [shape = 'u32[144,128]{1,0:T(1,128)}', space=vmem, size = 0x12000, scoped, tag = 'internal scratch']
  #allocation2 [shape = 'f32[128,32]{1,0:T(8,128)}', space=vmem, size = 0x10000, scoped, tag = 'scratch operand']
  %s0 = inlined_call_operand.vmem [shape: bf16[3,128,128], index: 0, kind: input, shape index: {}]
  %s1 = inlined_call_operand.vmem [shape: bf16[3,128,32], index: 1, kind: input, shape index: {}]
  %s2 = inlined_call_operand.vmem [shape: bf16[3,128,32], index: 2, kind: output, shape index: {}]
  %s3 = sld [smem:[#allocation0]]
  $region49: #{lightgcn_forward.4} parent=0
    _
  %s5 = ssub.s32 1, %s3
  %s6 = scalar_select 0, %s5, %s3
  loop: start=0, step=1, limit=5
  $region2: #{lightgcn_forward.4} parent=0 // loop_pre_header
    _
  $region3: #{lightgcn_forward.4} parent=0 // loop_header
    %s8 = sphi 0, %s12
    %p9 = scmp.ge.s32.totalorder %s8, 5
    %s15 = sphi 0, %s34
    %s16 = sphi 0, %s30
    %s17 = sphi 0, %s26
    %s18 = sphi 0, %s15
    %s19 = sphi 0, %s16
    %s20 = sphi 0, %s17
    %s21 = sphi 0, %s18
    %s22 = sphi 0, %s19
    %s23 = sphi 0, %s20
    %s41 = sphi 0, %s43
    %s44 = sphi 0, %s41
    %s45 = sphi 0, %s44
    %s61 = sphi 0, %s45
    %s69 = sphi 0, %s71
    %s72 = sphi 0, %s69
    %s73 = sphi 0, %s72
    %s89 = sphi 0, %s73
    %s97 = sphi 0, %s99
    %s100 = sphi 0, %s97
    %s101 = sphi 0, %s100
    %s117 = sphi 0, %s101
  $region4: #{lightgcn_forward.4} parent=0 // loop_header_branch
    %11 = sbr.rel (%p9) target = $region8
  $region5: #{lightgcn_forward.4} parent=0 // loop_body
    %s13 = ssub.s32 %s8, 1
    %s14 = ssub.s32 %s8, 2
    %s24 = sadd.s32 1, %s17
    %p25 = scmp.ge.s32.totalorder %s24, 1
    %s26 = scalar_select %p25, 0, %s24
    %s27 = sadd.s32 1, %s16
    %s28 = scalar_select %p25, %s27, %s16
    %p29 = scmp.ge.s32.totalorder %s28, 3
    %s30 = scalar_select %p29, 0, %s28
    %s31 = sadd.s32 1, %s15
    %s32 = scalar_select %p29, %s31, %s15
    %p33 = scmp.ge.s32.totalorder %s32, 1
    %s34 = scalar_select %p33, 0, %s32
    %s35 = ssub.s32 %s16, %s30
    %s36 = ssub.s32 %s15, %s34
    %s37 = sor.u32 %s35, %s36
    %s38 = ssub.s32 %s17, %s26
    %s39 = sor.u32 %s37, %s38
    %p40 = scmp.eq.s32.totalorder %s39, 0
    %s42 = sadd.s32 %s41, 1
    %s43 = scalar_select %p40, %s41, %s42
    %p46 = pneg %p40
    %p47 = scmp.eq.s32.totalorder %s8, 2
    %p48 = por %p46, %p47
    %p49 = scmp.ne.s32.totalorder %s41, %s44
    %p50 = scmp.eq.s32.totalorder %s8, 0
    %p51 = por %p49, %p50
    %p52 = scmp.ne.s32.totalorder %s41, %s44
    %p53 = scmp.eq.s32.totalorder %s13, 2
    %p54 = por %p52, %p53
    %p55 = scmp.ne.s32.totalorder %s44, %s45
    %p56 = scmp.eq.s32.totalorder %s13, 0
    %p57 = por %p55, %p56
    %p58 = scmp.ne.s32.totalorder %s44, %s45
    %p59 = scmp.eq.s32.totalorder %s14, 2
    %p60 = por %p58, %p59
    %p62 = scmp.ne.s32.totalorder %s45, %s61
    %p63 = scmp.eq.s32.totalorder %s14, 0
    %p64 = por %p62, %p63
    %s65 = ssub.s32 %s16, %s30
    %s66 = ssub.s32 %s17, %s26
    %s67 = sor.u32 %s65, %s66
    %p68 = scmp.eq.s32.totalorder %s67, 0
    %s70 = sadd.s32 %s69, 1
    %s71 = scalar_select %p68, %s69, %s70
    %p74 = pneg %p68
    %p75 = scmp.eq.s32.totalorder %s8, 2
    %p76 = por %p74, %p75
    %p77 = scmp.ne.s32.totalorder %s69, %s72
    %p78 = scmp.eq.s32.totalorder %s8, 0
    %p79 = por %p77, %p78
    %p80 = scmp.ne.s32.totalorder %s69, %s72
    %p81 = scmp.eq.s32.totalorder %s13, 2
    %p82 = por %p80, %p81
    %p83 = scmp.ne.s32.totalorder %s72, %s73
    %p84 = scmp.eq.s32.totalorder %s13, 0
    %p85 = por %p83, %p84
    %p86 = scmp.ne.s32.totalorder %s72, %s73
    %p87 = scmp.eq.s32.totalorder %s14, 2
    %p88 = por %p86, %p87
    %p90 = scmp.ne.s32.totalorder %s73, %s89
    %p91 = scmp.eq.s32.totalorder %s14, 0
    %p92 = por %p90, %p91
    %s93 = ssub.s32 %s16, %s30
    %s94 = ssub.s32 %s15, %s34
    %s95 = sor.u32 %s93, %s94
    %p96 = scmp.eq.s32.totalorder %s95, 0
    %s98 = sadd.s32 %s97, 1
    %s99 = scalar_select %p96, %s97, %s98
    %p102 = pneg %p96
    %p103 = scmp.eq.s32.totalorder %s8, 2
    %p104 = por %p102, %p103
    %p105 = scmp.ne.s32.totalorder %s97, %s100
    %p106 = scmp.eq.s32.totalorder %s8, 0
    %p107 = por %p105, %p106
    %p108 = scmp.ne.s32.totalorder %s97, %s100
    %p109 = scmp.eq.s32.totalorder %s13, 2
    %p110 = por %p108, %p109
    %p111 = scmp.ne.s32.totalorder %s100, %s101
    %p112 = scmp.eq.s32.totalorder %s13, 0
    %p113 = por %p111, %p112
    %p114 = scmp.ne.s32.totalorder %s100, %s101
    %p115 = scmp.eq.s32.totalorder %s14, 2
    %p116 = por %p114, %p115
    %p118 = scmp.ne.s32.totalorder %s101, %s117
    %p119 = scmp.eq.s32.totalorder %s14, 0
    %p120 = por %p118, %p119
    %p121 = scmp.le.s32.totalorder 1, %s8
    %p122 = scmp.lt.s32.totalorder %s8, 4
    %p123 = pnand %p121, %p122
    %p124 = pneg %p123
    // Predicated region
    $region9: #{lightgcn_forward.4} parent=5 // pred_check
      _
    $region10: #{lightgcn_forward.4} parent=5 // pred_check_branch
      %126 = sbr.rel (%p123) target = $region12
    $region11: #{lightgcn_forward.4} parent=5 // pred_region
      %s127 = ssub.s32 %s8, 1
    $region12: #{lightgcn_forward.4} parent=5 // pred_fallthru
      _
    %p128 = scmp.lt.s32.totalorder %s8, 3
    // Predicated region
    $region13: #{lightgcn_forward.4} parent=5 // pred_check
      %p129 = pneg %p128
    $region14: #{lightgcn_forward.4} parent=5 // pred_check_branch
      %131 = sbr.rel (%p129) target = $region16
    $region15: #{lightgcn_forward.4} parent=5 // pred_region
      // Predicated region
      $region17: #{lightgcn_forward.4} parent=15 // pred_check
        %p132 = pneg %p51
      $region18: #{lightgcn_forward.4} parent=15 // pred_check_branch
        %134 = sbr.rel (%p132) target = $region20
      $region19: #{lightgcn_forward.4} parent=15 // pred_region
        %s135 = smul.u32 16, %s15
        %p136 = scmp.lt.s32.totalorder %s16, 2
        %s137 = scalar_select %p136, %s16, 2
        %p138 = scmp.lt.s32.totalorder %s135, 15
        %s139 = scalar_select %p138, %s135, 15
        %p140 = scmp.lt.s32.totalorder %s17, 0
        %s141 = scalar_select %p140, %s17, 0
        %s142 = sadd.s32 %s141, %s139
        %s143 = smul.addr %s137, 16
        %s144 = sadd.s32 %s142, %s143
        %s145 = smul.addr %s144, 4
        %s146 = scalar_lea.vmem %s0, %s145
        %s147 = smul.u32 16, %s15
      $region20: #{lightgcn_forward.4} parent=15 // pred_fallthru
        _
      // Predicated region
      $region21: #{lightgcn_forward.4} parent=15 // pred_check
        %p148 = pneg %p79
      $region22: #{lightgcn_forward.4} parent=15 // pred_check_branch
        %150 = sbr.rel (%p148) target = $region24
      $region23: #{lightgcn_forward.4} parent=15 // pred_region
        %s151 = smul.u32 16, %s17
        %p152 = scmp.lt.s32.totalorder %s16, 2
        %s153 = scalar_select %p152, %s16, 2
        %p154 = scmp.lt.s32.totalorder %s151, 15
        %s155 = scalar_select %p154, %s151, 15
        %s156 = smul.addr %s153, 16
        %s157 = sadd.s32 %s155, %s156
        %s158 = smul.addr %s157, 4
        %s159 = scalar_lea.vmem %s1, %s158
        %s160 = smul.u32 16, %s17
      $region24: #{lightgcn_forward.4} parent=15 // pred_fallthru
        _
    $region16: #{lightgcn_forward.4} parent=5 // pred_fallthru
      _
    %p161 = scmp.le.s32.totalorder 1, %s8
    %p162 = scmp.lt.s32.totalorder %s8, 4
    %p163 = pnand %p161, %p162
    %p164 = pneg %p163
    // Predicated region
    $region25: #{lightgcn_forward.4} parent=5 // pred_check
      _
    $region26: #{lightgcn_forward.4} parent=5 // pred_check_branch
      %166 = sbr.rel (%p163) target = $region28
    $region27: #{lightgcn_forward.4} parent=5 // pred_region
      %s167 = ssub.s32 %s8, 1
      %s168 = smul.u32 16, %s18
      %p169 = scmp.lt.s32.totalorder %s19, 2
      %s170 = scalar_select %p169, %s19, 2
      %p171 = scmp.lt.s32.totalorder %s168, 15
      %s172 = scalar_select %p171, %s168, 15
      %p173 = scmp.lt.s32.totalorder %s20, 0
      %s174 = scalar_select %p173, %s20, 0
      %s175 = sadd.s32 %s174, %s172
      %s176 = smul.addr %s170, 16
      %s177 = sadd.s32 %s175, %s176
      %s178 = smul.addr %s177, 4
      %s179 = scalar_lea.vmem %s0, %s178
      %p180 = pneg %p57
      %p181 = pneg %p54
      %s182 = smul.u32 16, %s20
      %p183 = scmp.lt.s32.totalorder %s19, 2
      %s184 = scalar_select %p183, %s19, 2
      %p185 = scmp.lt.s32.totalorder %s182, 15
      %s186 = scalar_select %p185, %s182, 15
      %s187 = smul.addr %s184, 16
      %s188 = sadd.s32 %s186, %s187
      %s189 = smul.addr %s188, 4
      %s190 = scalar_lea.vmem %s1, %s189
      %p191 = pneg %p85
      %p192 = pneg %p82
      %p193 = pneg %p113
      %p194 = pneg %p110
      %s195 = smul.u32 16, %s18
      %p196 = scmp.lt.s32.totalorder %s19, 2
      %s197 = scalar_select %p196, %s19, 2
      %p198 = scmp.lt.s32.totalorder %s195, 15
      %s199 = scalar_select %p198, %s195, 15
      %s200 = smul.addr %s197, 16
      %s201 = sadd.s32 %s199, %s200
      %s202 = smul.addr %s201, 4
      %s203 = scalar_lea.vmem %s2, %s202
      %s204 = smul.u32 16, %s18
      %p205 = scmp.lt.s32.totalorder %s19, 2
      %s206 = scalar_select %p205, %s19, 2
      %p207 = scmp.lt.s32.totalorder %s204, 15
      %s208 = scalar_select %p207, %s204, 15
      %p209 = scmp.lt.s32.totalorder %s20, 0
      %s210 = scalar_select %p209, %s20, 0
      %s211 = sadd.s32 %s210, %s208
      %s212 = smul.addr %s206, 16
      %s213 = sadd.s32 %s211, %s212
      %s214 = smul.addr %s213, 4
      %s215 = scalar_lea.vmem %s0, %s214
      %s216 = smul.u32 16, %s18
      %s217 = smul.u32 16, %s20
      %p218 = scmp.lt.s32.totalorder %s19, 2
      %s219 = scalar_select %p218, %s19, 2
      %p220 = scmp.lt.s32.totalorder %s217, 15
      %s221 = scalar_select %p220, %s217, 15
      %s222 = smul.addr %s219, 16
      %s223 = sadd.s32 %s221, %s222
      %s224 = smul.addr %s223, 4
      %s225 = scalar_lea.vmem %s1, %s224
      %s226 = smul.u32 16, %s20
      %s227 = smul.u32 16, %s18
      %p228 = scmp.lt.s32.totalorder %s19, 2
      %s229 = scalar_select %p228, %s19, 2
      %p230 = scmp.lt.s32.totalorder %s227, 15
      %s231 = scalar_select %p230, %s227, 15
      %s232 = smul.addr %s229, 16
      %s233 = sadd.s32 %s231, %s232
      %s234 = smul.addr %s233, 4
      %s235 = scalar_lea.vmem %s2, %s234
      %s236 = smul.u32 16, %s18
      %p238 = scmp.eq.s32.totalorder %s20, 0
      // Predicated region
      $region29: #{lightgcn_forward.4} parent=27 // pred_check
        %p239 = pneg %p238
      $region30: #{lightgcn_forward.4} parent=27 // pred_check_branch
        %241 = sbr.rel (%p239) target = $region32
      $region31: #{lightgcn_forward.4} parent=27 // pred_region
        %vm242 = vcmask 261120
        %243 = vst.msk [vmem:[#allocation2] sm:$0xff] %vm242, 0.0
        %244 = vst.msk [vmem:[#allocation2 + $0x8] sm:$0xff] %vm242, 0.0
        %245 = vst.msk [vmem:[#allocation2 + $0x10] sm:$0xff] %vm242, 0.0
        %246 = vst.msk [vmem:[#allocation2 + $0x18] sm:$0xff] %vm242, 0.0
        %247 = vst.msk [vmem:[#allocation2 + $0x20] sm:$0xff] %vm242, 0.0
        %248 = vst.msk [vmem:[#allocation2 + $0x28] sm:$0xff] %vm242, 0.0
        %249 = vst.msk [vmem:[#allocation2 + $0x30] sm:$0xff] %vm242, 0.0
        %250 = vst.msk [vmem:[#allocation2 + $0x38] sm:$0xff] %vm242, 0.0
        %251 = vst.msk [vmem:[#allocation2 + $0x40] sm:$0xff] %vm242, 0.0
        %252 = vst.msk [vmem:[#allocation2 + $0x48] sm:$0xff] %vm242, 0.0
        %253 = vst.msk [vmem:[#allocation2 + $0x50] sm:$0xff] %vm242, 0.0
        %254 = vst.msk [vmem:[#allocation2 + $0x58] sm:$0xff] %vm242, 0.0
        %255 = vst.msk [vmem:[#allocation2 + $0x60] sm:$0xff] %vm242, 0.0
        %256 = vst.msk [vmem:[#allocation2 + $0x68] sm:$0xff] %vm242, 0.0
        %257 = vst.msk [vmem:[#allocation2 + $0x70] sm:$0xff] %vm242, 0.0
        %258 = vst.msk [vmem:[#allocation2 + $0x78] sm:$0xff] %vm242, 0.0
      $region32: #{lightgcn_forward.4} parent=27 // pred_fallthru
        _
      %v259 = vld [vmem:[#allocation2] sm:$0xff]
      %v260 = vld [vmem:[#allocation2 + $0x8] sm:$0xff]
      %v261 = vld [vmem:[#allocation2 + $0x10] sm:$0xff]
      %v262 = vld [vmem:[#allocation2 + $0x18] sm:$0xff]
      %v263 = vld [vmem:[#allocation2 + $0x20] sm:$0xff]
      %v264 = vld [vmem:[#allocation2 + $0x28] sm:$0xff]
      %v265 = vld [vmem:[#allocation2 + $0x30] sm:$0xff]
      %v266 = vld [vmem:[#allocation2 + $0x38] sm:$0xff]
      %v267 = vld [vmem:[#allocation2 + $0x40] sm:$0xff]
      %v268 = vld [vmem:[#allocation2 + $0x48] sm:$0xff]
      %v269 = vld [vmem:[#allocation2 + $0x50] sm:$0xff]
      %v270 = vld [vmem:[#allocation2 + $0x58] sm:$0xff]
      %v271 = vld [vmem:[#allocation2 + $0x60] sm:$0xff]
      %v272 = vld [vmem:[#allocation2 + $0x68] sm:$0xff]
      %v273 = vld [vmem:[#allocation2 + $0x70] sm:$0xff]
      %v274 = vld [vmem:[#allocation2 + $0x78] sm:$0xff]
      %v275 = vld [vmem:[%s215] sm:$0xf]
      %v276 = vld [vmem:[%s215 + $0x4] sm:$0xf]
      %v277 = vld [vmem:[%s215 + $0x8] sm:$0xf]
      %v278 = vld [vmem:[%s215 + $0xc] sm:$0xf]
      %v279 = vld [vmem:[%s215 + $0x10] sm:$0xf]
      %v280 = vld [vmem:[%s215 + $0x14] sm:$0xf]
      %v281 = vld [vmem:[%s215 + $0x18] sm:$0xf]
      %v282 = vld [vmem:[%s215 + $0x1c] sm:$0xf]
      %v283 = vld [vmem:[%s215 + $0x20] sm:$0xf]
      %v284 = vld [vmem:[%s215 + $0x24] sm:$0xf]
      %v285 = vld [vmem:[%s215 + $0x28] sm:$0xf]
      %v286 = vld [vmem:[%s215 + $0x2c] sm:$0xf]
      %v287 = vld [vmem:[%s215 + $0x30] sm:$0xf]
      %v288 = vld [vmem:[%s215 + $0x34] sm:$0xf]
      %v289 = vld [vmem:[%s215 + $0x38] sm:$0xf]
      %v290 = vld [vmem:[%s215 + $0x3c] sm:$0xf]
      %v291 = vld [vmem:[%s225] sm:$0xf]
      %v292 = vld [vmem:[%s225 + $0x4] sm:$0xf]
      %v293 = vld [vmem:[%s225 + $0x8] sm:$0xf]
      %v294 = vld [vmem:[%s225 + $0xc] sm:$0xf]
      %v295 = vld [vmem:[%s225 + $0x10] sm:$0xf]
      %v296 = vld [vmem:[%s225 + $0x14] sm:$0xf]
      %v297 = vld [vmem:[%s225 + $0x18] sm:$0xf]
      %v298 = vld [vmem:[%s225 + $0x1c] sm:$0xf]
      %v299 = vld [vmem:[%s225 + $0x20] sm:$0xf]
      %v300 = vld [vmem:[%s225 + $0x24] sm:$0xf]
      %v301 = vld [vmem:[%s225 + $0x28] sm:$0xf]
      %v302 = vld [vmem:[%s225 + $0x2c] sm:$0xf]
      %v303 = vld [vmem:[%s225 + $0x30] sm:$0xf]
      %v304 = vld [vmem:[%s225 + $0x34] sm:$0xf]
      %v305 = vld [vmem:[%s225 + $0x38] sm:$0xf]
      %v306 = vld [vmem:[%s225 + $0x3c] sm:$0xf]
      %v323 = vunpack.c.l.b16 %v275
      %v324 = vunpack.c.l.b16 %v276
      %v325 = vunpack.c.l.b16 %v277
      %v326 = vunpack.c.l.b16 %v278
      %v327 = vunpack.c.l.b16 %v279
      %v328 = vunpack.c.l.b16 %v280
      %v329 = vunpack.c.l.b16 %v281
      %v330 = vunpack.c.l.b16 %v282
      %v331 = vunpack.c.l.b16 %v283
      %v332 = vunpack.c.l.b16 %v284
      %v333 = vunpack.c.l.b16 %v285
      %v334 = vunpack.c.l.b16 %v286
      %v335 = vunpack.c.l.b16 %v287
      %v336 = vunpack.c.l.b16 %v288
      %v337 = vunpack.c.l.b16 %v289
      %v338 = vunpack.c.l.b16 %v290
      %v339 = vpack.c.b16 %v324, %v323
      %v340 = vpack.c.b16 %v326, %v325
      %v341 = vpack.c.b16 %v328, %v327
      %v342 = vpack.c.b16 %v330, %v329
      %v343 = vpack.c.b16 %v332, %v331
      %v344 = vpack.c.b16 %v334, %v333
      %v345 = vpack.c.b16 %v336, %v335
      %v346 = vpack.c.b16 %v338, %v337
      %v371 = vunpack.c.l.b16 %v291
      %v372 = vunpack.c.l.b16 %v292
      %v373 = vunpack.c.l.b16 %v293
      %v374 = vunpack.c.l.b16 %v294
      %v375 = vunpack.c.l.b16 %v295
      %v376 = vunpack.c.l.b16 %v296
      %v377 = vunpack.c.l.b16 %v297
      %v378 = vunpack.c.l.b16 %v298
      %v379 = vunpack.c.l.b16 %v299
      %v380 = vunpack.c.l.b16 %v300
      %v381 = vunpack.c.l.b16 %v301
      %v382 = vunpack.c.l.b16 %v302
      %v383 = vunpack.c.l.b16 %v303
      %v384 = vunpack.c.l.b16 %v304
      %v385 = vunpack.c.l.b16 %v305
      %v386 = vunpack.c.l.b16 %v306
      %v387 = vpack.c.b16 %v372, %v371
      %v388 = vpack.c.b16 %v374, %v373
      %v389 = vpack.c.b16 %v376, %v375
      %v390 = vpack.c.b16 %v378, %v377
      %v391 = vpack.c.b16 %v380, %v379
      %v392 = vpack.c.b16 %v382, %v381
      %v393 = vpack.c.b16 %v384, %v383
      %v394 = vpack.c.b16 %v386, %v385
      %403 = vmatprep.subr.bf16.mxu0 0
      %404 = vmatpush1.bf16.msra.mxu0 %v394
      %405 = vmatprep.subr.bf16.mxu0 0
      %406 = vmatpush1.bf16.msra.mxu0 %v393
      %407 = vmatprep.subr.bf16.mxu0 0
      %408 = vmatpush1.bf16.msra.mxu0 %v392
      %409 = vmatprep.subr.bf16.mxu0 0
      %410 = vmatpush1.bf16.msra.mxu0 %v391
      %411 = vmatprep.subr.bf16.mxu0 0
      %412 = vmatpush1.bf16.msra.mxu0 %v390
      %413 = vmatprep.subr.bf16.mxu0 0
      %414 = vmatpush1.bf16.msra.mxu0 %v389
      %415 = vmatprep.subr.bf16.mxu0 0
      %416 = vmatpush1.bf16.msra.mxu0 %v388
      %417 = vmatprep.subr.bf16.mxu0 0
      %418 = vmatpush1.bf16.msra.mxu0 %v387
      %419 = vmatprep.subr.bf16.mxu0 0
      %420 = vmatpush2.bf16.msra.mxu0 0
      %421 = vmatprep.subr.bf16.mxu0 0
      %422 = vmatpush2.bf16.msra.mxu0 0
      %423 = vmatprep.subr.bf16.mxu0 0
      %424 = vmatpush2.bf16.msra.mxu0 0
      %425 = vmatprep.subr.bf16.mxu0 0
      %426 = vmatpush2.bf16.msra.mxu0 0
      %427 = vmatprep.subr.bf16.mxu0 0
      %428 = vmatpush2.bf16.msra.mxu0 0
      %429 = vmatprep.subr.bf16.mxu0 0
      %430 = vmatpush2.bf16.msra.mxu0 0
      %431 = vmatprep.subr.bf16.mxu0 0
      %432 = vmatpush2.bf16.msra.mxu0 0
      %433 = vmatprep.subr.bf16.mxu0 0
      %434 = vmatpush2.bf16.msra.mxu0 0
      %435 = vmatprep.mubr.bf16.mxu0 0
      %436 = vmatmul.mubr.bf16.gmra.mxu0 %v339
      %v437 = vpop.f32.mrf.mxu0
      %v438 = vadd.f32 0.0, %v437
      %v439 = vpop.f32.mrf.mxu0
      %v440 = vpop.f32.mrf.mxu0
      %v441 = vadd.f32 0.0, %v440
      %v442 = vpop.f32.mrf.mxu0
      %443 = vmatprep.mubr.bf16.mxu0 0
      %444 = vmatmul.mubr.bf16.gmra.mxu0 %v340
      %v445 = vpop.f32.mrf.mxu0
      %v446 = vadd.f32 0.0, %v445
      %v447 = vpop.f32.mrf.mxu0
      %v448 = vpop.f32.mrf.mxu0
      %v449 = vadd.f32 0.0, %v448
      %v450 = vpop.f32.mrf.mxu0
      %451 = vmatprep.mubr.bf16.mxu0 0
      %452 = vmatmul.mubr.bf16.gmra.mxu0 %v341
      %v453 = vpop.f32.mrf.mxu0
      %v454 = vadd.f32 0.0, %v453
      %v455 = vpop.f32.mrf.mxu0
      %v456 = vpop.f32.mrf.mxu0
      %v457 = vadd.f32 0.0, %v456
      %v458 = vpop.f32.mrf.mxu0
      %459 = vmatprep.mubr.bf16.mxu0 0
      %460 = vmatmul.mubr.bf16.gmra.mxu0 %v342
      %v461 = vpop.f32.mrf.mxu0
      %v462 = vadd.f32 0.0, %v461
      %v463 = vpop.f32.mrf.mxu0
      %v464 = vpop.f32.mrf.mxu0
      %v465 = vadd.f32 0.0, %v464
      %v466 = vpop.f32.mrf.mxu0
      %467 = vmatprep.mubr.bf16.mxu0 0
      %468 = vmatmul.mubr.bf16.gmra.mxu0 %v343
      %v469 = vpop.f32.mrf.mxu0
      %v470 = vadd.f32 0.0, %v469
      %v471 = vpop.f32.mrf.mxu0
      %v472 = vpop.f32.mrf.mxu0
      %v473 = vadd.f32 0.0, %v472
      %v474 = vpop.f32.mrf.mxu0
      %475 = vmatprep.mubr.bf16.mxu0 0
      %476 = vmatmul.mubr.bf16.gmra.mxu0 %v344
      %v477 = vpop.f32.mrf.mxu0
      %v478 = vadd.f32 0.0, %v477
      %v479 = vpop.f32.mrf.mxu0
      %v480 = vpop.f32.mrf.mxu0
      %v481 = vadd.f32 0.0, %v480
      %v482 = vpop.f32.mrf.mxu0
      %483 = vmatprep.mubr.bf16.mxu0 0
      %484 = vmatmul.mubr.bf16.gmra.mxu0 %v345
      %v485 = vpop.f32.mrf.mxu0
      %v486 = vadd.f32 0.0, %v485
      %v487 = vpop.f32.mrf.mxu0
      %v488 = vpop.f32.mrf.mxu0
      %v489 = vadd.f32 0.0, %v488
      %v490 = vpop.f32.mrf.mxu0
      %491 = vmatprep.mubr.bf16.mxu0 0
      %492 = vmatmul.mubr.bf16.gmra.mxu0 %v346
      %v493 = vpop.f32.mrf.mxu0
      %v494 = vadd.f32 0.0, %v493
      %v495 = vpop.f32.mrf.mxu0
      %v496 = vpop.f32.mrf.mxu0
      %v497 = vadd.f32 0.0, %v496
      %v498 = vpop.f32.mrf.mxu0
      %499 = vdwg.mxu0
      %v500 = vadd.f32 %v259, %v438
      %v501 = vadd.f32 %v260, %v441
      %v502 = vadd.f32 %v261, %v446
      %v503 = vadd.f32 %v262, %v449
      %v504 = vadd.f32 %v263, %v454
      %v505 = vadd.f32 %v264, %v457
      %v506 = vadd.f32 %v265, %v462
      %v507 = vadd.f32 %v266, %v465
      %v508 = vadd.f32 %v267, %v470
      %v509 = vadd.f32 %v268, %v473
      %v510 = vadd.f32 %v269, %v478
      %v511 = vadd.f32 %v270, %v481
      %v512 = vadd.f32 %v271, %v486
      %v513 = vadd.f32 %v272, %v489
      %v514 = vadd.f32 %v273, %v494
      %v515 = vadd.f32 %v274, %v497
      %vm516 = vcmask 261120
      %517 = vst.msk [vmem:[#allocation2] sm:$0xff] %vm516, %v500
      %518 = vst.msk [vmem:[#allocation2 + $0x8] sm:$0xff] %vm516, %v501
      %519 = vst.msk [vmem:[#allocation2 + $0x10] sm:$0xff] %vm516, %v502
      %520 = vst.msk [vmem:[#allocation2 + $0x18] sm:$0xff] %vm516, %v503
      %521 = vst.msk [vmem:[#allocation2 + $0x20] sm:$0xff] %vm516, %v504
      %522 = vst.msk [vmem:[#allocation2 + $0x28] sm:$0xff] %vm516, %v505
      %523 = vst.msk [vmem:[#allocation2 + $0x30] sm:$0xff] %vm516, %v506
      %524 = vst.msk [vmem:[#allocation2 + $0x38] sm:$0xff] %vm516, %v507
      %525 = vst.msk [vmem:[#allocation2 + $0x40] sm:$0xff] %vm516, %v508
      %526 = vst.msk [vmem:[#allocation2 + $0x48] sm:$0xff] %vm516, %v509
      %527 = vst.msk [vmem:[#allocation2 + $0x50] sm:$0xff] %vm516, %v510
      %528 = vst.msk [vmem:[#allocation2 + $0x58] sm:$0xff] %vm516, %v511
      %529 = vst.msk [vmem:[#allocation2 + $0x60] sm:$0xff] %vm516, %v512
      %530 = vst.msk [vmem:[#allocation2 + $0x68] sm:$0xff] %vm516, %v513
      %531 = vst.msk [vmem:[#allocation2 + $0x70] sm:$0xff] %vm516, %v514
      %532 = vst.msk [vmem:[#allocation2 + $0x78] sm:$0xff] %vm516, %v515
      // Predicated region
      $region33: #{lightgcn_forward.4} parent=27 // pred_check
        %p533 = pneg %p238
      $region34: #{lightgcn_forward.4} parent=27 // pred_check_branch
        %535 = sbr.rel (%p533) target = $region36
      $region35: #{lightgcn_forward.4} parent=27 // pred_region
        %v536 = vld [vmem:[#allocation2] sm:$0xff]
        %v537 = vld [vmem:[#allocation2 + $0x8] sm:$0xff]
        %v538 = vld [vmem:[#allocation2 + $0x10] sm:$0xff]
        %v539 = vld [vmem:[#allocation2 + $0x18] sm:$0xff]
        %v540 = vld [vmem:[#allocation2 + $0x20] sm:$0xff]
        %v541 = vld [vmem:[#allocation2 + $0x28] sm:$0xff]
        %v542 = vld [vmem:[#allocation2 + $0x30] sm:$0xff]
        %v543 = vld [vmem:[#allocation2 + $0x38] sm:$0xff]
        %v544 = vld [vmem:[#allocation2 + $0x40] sm:$0xff]
        %v545 = vld [vmem:[#allocation2 + $0x48] sm:$0xff]
        %v546 = vld [vmem:[#allocation2 + $0x50] sm:$0xff]
        %v547 = vld [vmem:[#allocation2 + $0x58] sm:$0xff]
        %v548 = vld [vmem:[#allocation2 + $0x60] sm:$0xff]
        %v549 = vld [vmem:[#allocation2 + $0x68] sm:$0xff]
        %v550 = vld [vmem:[#allocation2 + $0x70] sm:$0xff]
        %v551 = vld [vmem:[#allocation2 + $0x78] sm:$0xff]
        %v552 = vpack.c.bf16 %v537, %v536
        %v553 = vpack.c.bf16 %v539, %v538
        %v554 = vpack.c.bf16 %v541, %v540
        %v555 = vpack.c.bf16 %v543, %v542
        %v556 = vpack.c.bf16 %v545, %v544
        %v557 = vpack.c.bf16 %v547, %v546
        %v558 = vpack.c.bf16 %v549, %v548
        %v559 = vpack.c.bf16 %v551, %v550
        %v568 = vunpack.c.l.b16 %v552
        %v569 = vunpack.c.h.b16 %v552
        %v570 = vunpack.c.l.b16 %v553
        %v571 = vunpack.c.h.b16 %v553
        %v572 = vunpack.c.l.b16 %v554
        %v573 = vunpack.c.h.b16 %v554
        %v574 = vunpack.c.l.b16 %v555
        %v575 = vunpack.c.h.b16 %v555
        %v576 = vunpack.c.l.b16 %v556
        %v577 = vunpack.c.h.b16 %v556
        %v578 = vunpack.c.l.b16 %v557
        %v579 = vunpack.c.h.b16 %v557
        %v580 = vunpack.c.l.b16 %v558
        %v581 = vunpack.c.h.b16 %v558
        %v582 = vunpack.c.l.b16 %v559
        %v583 = vunpack.c.h.b16 %v559
        %v584 = vpack.c.b16 %v568, %v568
        %v585 = vpack.c.b16 %v569, %v569
        %v586 = vpack.c.b16 %v570, %v570
        %v587 = vpack.c.b16 %v571, %v571
        %v588 = vpack.c.b16 %v572, %v572
        %v589 = vpack.c.b16 %v573, %v573
        %v590 = vpack.c.b16 %v574, %v574
        %v591 = vpack.c.b16 %v575, %v575
        %v592 = vpack.c.b16 %v576, %v576
        %v593 = vpack.c.b16 %v577, %v577
        %v594 = vpack.c.b16 %v578, %v578
        %v595 = vpack.c.b16 %v579, %v579
        %v596 = vpack.c.b16 %v580, %v580
        %v597 = vpack.c.b16 %v581, %v581
        %v598 = vpack.c.b16 %v582, %v582
        %v599 = vpack.c.b16 %v583, %v583
        %vm616 = vcmask 257024
        %617 = vst.msk [vmem:[%s235] sm:$0xf] %vm616, %v584
        %618 = vst.msk [vmem:[%s235 + $0x4] sm:$0xf] %vm616, %v585
        %619 = vst.msk [vmem:[%s235 + $0x8] sm:$0xf] %vm616, %v586
        %620 = vst.msk [vmem:[%s235 + $0xc] sm:$0xf] %vm616, %v587
        %621 = vst.msk [vmem:[%s235 + $0x10] sm:$0xf] %vm616, %v588
        %622 = vst.msk [vmem:[%s235 + $0x14] sm:$0xf] %vm616, %v589
        %623 = vst.msk [vmem:[%s235 + $0x18] sm:$0xf] %vm616, %v590
        %624 = vst.msk [vmem:[%s235 + $0x1c] sm:$0xf] %vm616, %v591
        %625 = vst.msk [vmem:[%s235 + $0x20] sm:$0xf] %vm616, %v592
        %626 = vst.msk [vmem:[%s235 + $0x24] sm:$0xf] %vm616, %v593
        %627 = vst.msk [vmem:[%s235 + $0x28] sm:$0xf] %vm616, %v594
        %628 = vst.msk [vmem:[%s235 + $0x2c] sm:$0xf] %vm616, %v595
        %629 = vst.msk [vmem:[%s235 + $0x30] sm:$0xf] %vm616, %v596
        %630 = vst.msk [vmem:[%s235 + $0x34] sm:$0xf] %vm616, %v597
        %631 = vst.msk [vmem:[%s235 + $0x38] sm:$0xf] %vm616, %v598
        %632 = vst.msk [vmem:[%s235 + $0x3c] sm:$0xf] %vm616, %v599
      $region36: #{lightgcn_forward.4} parent=27 // pred_fallthru
        _
      %s633 = smul.u32 16, %s18
      %p634 = scmp.lt.s32.totalorder %s19, 2
      %s635 = scalar_select %p634, %s19, 2
      %p636 = scmp.lt.s32.totalorder %s633, 15
      %s637 = scalar_select %p636, %s633, 15
      %s638 = smul.addr %s635, 16
      %s639 = sadd.s32 %s637, %s638
      %s640 = smul.addr %s639, 4
      %s641 = scalar_lea.vmem %s2, %s640
      // Predicated region
      $region37: #{lightgcn_forward.4} parent=27 // pred_check
        %p642 = pneg %p110
      $region38: #{lightgcn_forward.4} parent=27 // pred_check_branch
        %644 = sbr.rel (%p642) target = $region40
      $region39: #{lightgcn_forward.4} parent=27 // pred_region
        %s645 = smul.u32 16, %s18
      $region40: #{lightgcn_forward.4} parent=27 // pred_fallthru
        _
    $region28: #{lightgcn_forward.4} parent=5 // pred_fallthru
      _
    %p646 = scmp.le.s32.totalorder 2, %s8
    // Predicated region
    $region41: #{lightgcn_forward.4} parent=5 // pred_check
      %p647 = pneg %p646
    $region42: #{lightgcn_forward.4} parent=5 // pred_check_branch
      %649 = sbr.rel (%p647) target = $region44
    $region43: #{lightgcn_forward.4} parent=5 // pred_region
      %s650 = ssub.s32 %s8, 2
      // Predicated region
      $region45: #{lightgcn_forward.4} parent=43 // pred_check
        %p651 = pneg %p116
      $region46: #{lightgcn_forward.4} parent=43 // pred_check_branch
        %653 = sbr.rel (%p651) target = $region48
      $region47: #{lightgcn_forward.4} parent=43 // pred_region
        %s654 = smul.u32 16, %s21
        %p655 = scmp.lt.s32.totalorder %s22, 2
        %s656 = scalar_select %p655, %s22, 2
        %p657 = scmp.lt.s32.totalorder %s654, 15
        %s658 = scalar_select %p657, %s654, 15
        %s659 = smul.addr %s656, 16
        %s660 = sadd.s32 %s658, %s659
        %s661 = smul.addr %s660, 4
        %s662 = scalar_lea.vmem %s2, %s661
      $region48: #{lightgcn_forward.4} parent=43 // pred_fallthru
        _
    $region44: #{lightgcn_forward.4} parent=5 // pred_fallthru
      _
  $region6: #{lightgcn_forward.4} parent=0 // loop_footer
    %s12 = sadd.s32 1, %s8
  $region7: #{lightgcn_forward.4} parent=0 // loop_footer_branch
    %7 = sbr.rel target = $region3
  $region8: #{lightgcn_forward.4} parent=0 // loop_exit
    _

// kernel: lightgcn_forward.7
$region0: #{lightgcn_forward.7}
  #allocation0 [shape = 'u32[]', space=smem, size = 0x4, offset = 0x4, fixed_abs, tag = 'smem constant byte address 0x4 - core index']
  #allocation1 [shape = 'u32[144,128]{1,0:T(1,128)}', space=vmem, size = 0x12000, scoped, tag = 'internal scratch']
  %s0 = inlined_call_operand.vmem [shape: f32[8,32], index: 0, kind: input, shape index: {}]
  %s1 = inlined_call_operand.vmem [shape: f32[8,32], index: 1, kind: input, shape index: {}]
  %s2 = inlined_call_operand.vmem [shape: f32[32,128], index: 2, kind: input, shape index: {}]
  %s3 = inlined_call_operand.hbm [shape: f32[8,128], index: 3, kind: output, shape index: {}]
  %s4 = sld [smem:[#allocation0]]
  $region22: #{lightgcn_forward.7} parent=0
    _
  %s6 = ssub.s32 1, %s4
  %s7 = scalar_select 0, %s6, %s4
  $region1: #{lightgcn_forward.7} parent=0
    #allocation2 [shape = 'u8[4096]{0}', space=vmem, size = 0x1000, scoped, tag = 'output window, operand 0, single buffered']
    #allocation3 [shape = 's32[1]{0}', space=sflag, size = 0x4, scoped, tag = 'scoped memory for lightgcn_forward.7']
    %8 = vsyncpa [#allocation3], 0
    // Predicated region
    $region2: #{lightgcn_forward.7} parent=1 // pred_check
      _
    $region3: #{lightgcn_forward.7} parent=1 // pred_check_branch
      %10 = sbr.rel (0) target = $region5
    $region4: #{lightgcn_forward.7} parent=1 // pred_region
      _
    $region5: #{lightgcn_forward.7} parent=1 // pred_fallthru
      _
    // Predicated region
    $region6: #{lightgcn_forward.7} parent=1 // pred_check
      _
    $region7: #{lightgcn_forward.7} parent=1 // pred_check_branch
      %12 = sbr.rel (0) target = $region9
    $region8: #{lightgcn_forward.7} parent=1 // pred_region
      _
    $region9: #{lightgcn_forward.7} parent=1 // pred_fallthru
      _
    // Predicated region
    $region10: #{lightgcn_forward.7} parent=1 // pred_check
      _
    $region11: #{lightgcn_forward.7} parent=1 // pred_check_branch
      %14 = sbr.rel (0) target = $region13
    $region12: #{lightgcn_forward.7} parent=1 // pred_region
      _
    $region13: #{lightgcn_forward.7} parent=1 // pred_fallthru
      _
    %v15 = vld [vmem:[%s0] sm:$0xff]
    %v16 = vld [vmem:[%s1] sm:$0xff]
    %v17 = vmul.f32 %v15, %v16
    %vm18 = vcmask 261120
    %v19 = vsel %vm18, %v17, 0.0
    %20 = vadd.xlane.f32.xlu0 %v19
    %v21 = vpop.xlane.xlu0 %20
    %v22 = vld [vmem:[%s2] sm:$0xff]
    %v23 = vld [vmem:[%s2 + $0x8] sm:$0xff]
    %v24 = vld [vmem:[%s2 + $0x10] sm:$0xff]
    %v25 = vld [vmem:[%s2 + $0x18] sm:$0xff]
    %v27 = vsel %vm18, %v15, 0
    %29 = vmatprep.subr.mxu0 0.0
    %30 = vmatpush1.msra.mxu0 0.0
    %31 = vmatprep.subr.mxu0 0.0
    %32 = vmatpush1.msra.mxu0 0.0
    %33 = vmatprep.subr.mxu0 0.0
    %34 = vmatpush1.msra.mxu0 0.0
    %35 = vmatprep.subr.mxu0 0.0
    %36 = vmatpush1.msra.mxu0 0.0
    %37 = vmatprep.subr.mxu0 0.0
    %38 = vmatpush1.msra.mxu0 0.0
    %39 = vmatprep.subr.mxu0 0.0
    %40 = vmatpush1.msra.mxu0 0.0
    %41 = vmatprep.subr.mxu0 0.0
    %42 = vmatpush1.msra.mxu0 0.0
    %43 = vmatprep.subr.mxu0 0.0
    %44 = vmatpush1.msra.mxu0 0.0
    %45 = vmatprep.subr.mxu0 0.0
    %46 = vmatpush1.msra.mxu0 0.0
    %47 = vmatprep.subr.mxu0 0.0
    %48 = vmatpush1.msra.mxu0 0.0
    %49 = vmatprep.subr.mxu0 0.0
    %50 = vmatpush1.msra.mxu0 0.0
    %51 = vmatprep.subr.mxu0 0.0
    %52 = vmatpush1.msra.mxu0 0.0
    %53 = vmatprep.subr.mxu0 0.0
    %54 = vmatpush1.msra.mxu0 %v25
    %55 = vmatprep.subr.mxu0 0.0
    %56 = vmatpush1.msra.mxu0 %v24
    %57 = vmatprep.subr.mxu0 0.0
    %58 = vmatpush1.msra.mxu0 %v23
    %59 = vmatprep.subr.mxu0 0.0
    %60 = vmatpush1.msra.mxu0 %v22
    %61 = vmatprep.subr.mxu0 0.0
    %62 = vmatpush2.msra.mxu0 0.0
    %63 = vmatprep.subr.mxu0 0.0
    %64 = vmatpush2.msra.mxu0 0.0
    %65 = vmatprep.subr.mxu0 0.0
    %66 = vmatpush2.msra.mxu0 0.0
    %67 = vmatprep.subr.mxu0 0.0
    %68 = vmatpush2.msra.mxu0 0.0
    %69 = vmatprep.subr.mxu0 0.0
    %70 = vmatpush2.msra.mxu0 0.0
    %71 = vmatprep.subr.mxu0 0.0
    %72 = vmatpush2.msra.mxu0 0.0
    %73 = vmatprep.subr.mxu0 0.0
    %74 = vmatpush2.msra.mxu0 0.0
    %75 = vmatprep.subr.mxu0 0.0
    %76 = vmatpush2.msra.mxu0 0.0
    %77 = vmatprep.subr.mxu0 0.0
    %78 = vmatpush2.msra.mxu0 0.0
    %79 = vmatprep.subr.mxu0 0.0
    %80 = vmatpush2.msra.mxu0 0.0
    %81 = vmatprep.subr.mxu0 0.0
    %82 = vmatpush2.msra.mxu0 0.0
    %83 = vmatprep.subr.mxu0 0.0
    %84 = vmatpush2.msra.mxu0 0.0
    %85 = vmatprep.subr.mxu0 0.0
    %86 = vmatpush2.msra.mxu0 0.0
    %87 = vmatprep.subr.mxu0 0.0
    %88 = vmatpush2.msra.mxu0 0.0
    %89 = vmatprep.subr.mxu0 0.0
    %90 = vmatpush2.msra.mxu0 0.0
    %91 = vmatprep.subr.mxu0 0.0
    %92 = vmatpush2.msra.mxu0 0.0
    %93 = vmatprep.mubr.f32.mxu0 0.0
    %94 = vmatmul.mubr.f32.gmra.mxu0 %v27
    %v95 = vpop.f32.mrf.mxu0
    %v96 = vadd.f32 0.0, %v95
    %v97 = vpop.f32.mrf.mxu0
    %98 = vdwg.mxu0
    %v99 = vsub.f32 %v96, %v21
    %100 = vst [vmem:[#allocation2] sm:$0xff] %v99
    // Predicated region
    $region14: #{lightgcn_forward.7} parent=1 // pred_check
      _
    $region15: #{lightgcn_forward.7} parent=1 // pred_check_branch
      %102 = sbr.rel (0) target = $region17
    $region16: #{lightgcn_forward.7} parent=1 // pred_region
      %s104 = ssub.s32 128, 128
      %105 = vsyncadd [#allocation3], %s104
      %s107 = sshll.u32 [#allocation2], 4
      %s108 = int_to_ptr.vmem [resolvable:$true] %s107
      %110 = dma.vmem_to_hbm [thread:$0]  %s108, 128, %s3, [#allocation3]
    $region17: #{lightgcn_forward.7} parent=1 // pred_fallthru
      _
    // Predicated region
    $region18: #{lightgcn_forward.7} parent=1 // pred_check
      _
    $region19: #{lightgcn_forward.7} parent=1 // pred_check_branch
      %112 = sbr.rel (0) target = $region21
    $region20: #{lightgcn_forward.7} parent=1 // pred_region
      %113 = dma.done [#allocation3], 128
    $region21: #{lightgcn_forward.7} parent=1 // pred_fallthru
      _
    %114 = vsyncpa [#allocation3], 1

</llo_original>
